<compile_context>
chip_gen: v7x
topology: tpu7x:2x2x1
jax: 0.10.0
libtpu: 0.0.40
codegen_flags: <defaults>
</compile_context>

<pallas_src>
import functools

import jax
import jax.numpy as jnp
from jax.experimental import pallas as pl
from jax.experimental.pallas import tpu as pltpu


def _round_up(x, m):
    return ((x + m - 1) // m) * m


# ----------------------------------------------------------------------------
# Fused MLP kernel: (L-1) x [Linear + ReLU] + final Linear, one row-slab/tile.
# refs layout: x_ref, w_0..w_{L-1}, b_0..b_{L-1}, o_ref
# ----------------------------------------------------------------------------
def _make_mlp_kernel(num_layers):
    def kernel(*refs):
        x_ref = refs[0]
        w_refs = refs[1:1 + num_layers]
        b_refs = refs[1 + num_layers:1 + 2 * num_layers]
        o_ref = refs[-1]

        h = x_ref[...]                                        # bf16 (tm, K0)
        for li in range(num_layers):
            y = jnp.dot(h, w_refs[li][...],
                        preferred_element_type=jnp.float32)   # MXU, f32 acc
            y = y + b_refs[li][...]
            if li + 1 < num_layers:
                h = jnp.maximum(y, 0.0).astype(jnp.bfloat16)  # VPU epilogue
            else:
                o_ref[...] = y                                # lane-dense store
    return kernel


def mlp_forward(x, weights, biases, *, tile_m=512):
    """Forward of `MLP`.

    x       : (..., in_dim) f32
    weights : list of (K_i, N_i) f32 arrays (i.e. PyTorch nn.Linear weight.T)
    biases  : list of (N_i,)   f32 arrays
    """
    num_layers = len(weights)
    in_dim = weights[0].shape[0]
    out_dim = weights[-1].shape[1]

    lead_shape = x.shape[:-1]
    M = 1
    for s in lead_shape:
        M *= s
    x2 = x.reshape(M, in_dim)

    # Pad each layer's output (and hence the next layer's K) to a lane multiple.
    dims = [in_dim] + [_round_up(w.shape[1], 128) for w in weights]
    w_p, b_p = [], []
    for li, (w, b) in enumerate(zip(weights, biases)):
        kp, np_ = dims[li], dims[li + 1]
        wp = jnp.zeros((kp, np_), jnp.float32).at[:w.shape[0], :w.shape[1]].set(w)
        bp = jnp.zeros((1, np_), jnp.float32).at[0, :b.shape[0]].set(b)
        w_p.append(wp.astype(jnp.bfloat16))
        b_p.append(bp)

    tm = tile_m if M >= tile_m else max(_round_up(M, 8), 8)
    Mp = _round_up(M, tm)
    xp = jnp.pad(x2, ((0, Mp - M), (0, 0))).astype(jnp.bfloat16)

    out_pad = dims[-1]
    kernel = _make_mlp_kernel(num_layers)

    in_specs = [pl.BlockSpec((tm, in_dim), lambda i: (i, 0))]
    for li in range(num_layers):
        in_specs.append(pl.BlockSpec((dims[li], dims[li + 1]), lambda i: (0, 0)))
    for li in range(num_layers):
        in_specs.append(pl.BlockSpec((1, dims[li + 1]), lambda i: (0, 0)))

    out = pl.pallas_call(
        kernel,
        out_shape=jax.ShapeDtypeStruct((Mp, out_pad), jnp.float32),
        grid=(Mp // tm,),
        in_specs=in_specs,
        out_specs=pl.BlockSpec((tm, out_pad), lambda i: (i, 0)),
        compiler_params=pltpu.CompilerParams(
            dimension_semantics=("parallel",)),
    )(xp, *w_p, *b_p)

    out = out[:M, :out_dim]
    return out.reshape(*lead_shape, out_dim)


# ----------------------------------------------------------------------------
# Pure-JAX reference mirroring the kernel's bf16-input / f32-accumulate math.
# ----------------------------------------------------------------------------
def mlp_reference(x, weights, biases):
    lead = x.shape[:-1]
    h = x.reshape(-1, x.shape[-1])
    num_layers = len(weights)
    for li, (w, b) in enumerate(zip(weights, biases)):
        h = jnp.dot(h.astype(jnp.bfloat16).astype(jnp.float32),
                    w.astype(jnp.bfloat16).astype(jnp.float32)) + b
        if li + 1 < num_layers:
            h = jnp.maximum(h, 0.0)
        h = h if li + 1 == num_layers else h  # keep f32 between layers
    return h.reshape(*lead, weights[-1].shape[1])


# ----------------------------------------------------------------------------
# Parameter init (PyTorch nn.Linear default: U(-1/sqrt(fan_in), 1/sqrt(fan_in)))
# ----------------------------------------------------------------------------
def init_mlp(key, in_dim, hidden_list, out_dim):
    dims = [in_dim] + list(hidden_list) + [out_dim]
    weights, biases = [], []
    for i in range(len(dims) - 1):
        key, k1, k2 = jax.random.split(key, 3)
        bound = 1.0 / (dims[i] ** 0.5)
        weights.append(jax.random.uniform(k1, (dims[i], dims[i + 1]),
                                          jnp.float32, -bound, bound))
        biases.append(jax.random.uniform(k2, (dims[i + 1],),
                                         jnp.float32, -bound, bound))
    return weights, biases


# ----------------------------------------------------------------------------
if __name__ == "__main__":
    # Shapes consistent with the module's use inside QIS_GAN_x16:
    #   in_dim = feat_dim + guide_dim + 2 = 130, hidden_list = [256, 128],
    #   out_dim = NIR_dim = 33; queries = batch * 32 * 32 rows.
    in_dim = 130
    hidden_list = [256, 128]
    out_dim = 33
    batch = 2
    n_query = 1024          # e.g. 32 x 32 query coordinates per image

    key = jax.random.PRNGKey(0)
    k_x, k_p = jax.random.split(key)
    x = jax.random.normal(k_x, (batch, n_query, in_dim), jnp.float32)
    weights, biases = init_mlp(k_p, in_dim, hidden_list, out_dim)

    fwd = jax.jit(functools.partial(mlp_forward, tile_m=512))
    out = fwd(x, weights, biases)
    jax.block_until_ready(out)

    assert out.shape == (batch, n_query, out_dim)
    assert bool(jnp.all(jnp.isfinite(out)))

    ref = mlp_reference(x, weights, biases)
    assert bool(jnp.allclose(out, ref, atol=5e-2, rtol=5e-2))

    print("KERNEL_OK")
</pallas_src>

<mosaic_0001>
module attributes {stable_mosaic.version = 11 : i64} {
  func.func @kernel(%arg0: i32, %arg1: memref<512x130xbf16, #tpu.memory_space<vmem>>, %arg2: memref<130x256xbf16, #tpu.memory_space<vmem>>, %arg3: memref<256x128xbf16, #tpu.memory_space<vmem>>, %arg4: memref<128x128xbf16, #tpu.memory_space<vmem>>, %arg5: memref<1x256xf32, #tpu.memory_space<vmem>>, %arg6: memref<1x128xf32, #tpu.memory_space<vmem>>, %arg7: memref<1x128xf32, #tpu.memory_space<vmem>>, %arg8: memref<512x128xf32, #tpu.memory_space<vmem>>) attributes {dimension_semantics = [#tpu.dimension_semantics<parallel>], iteration_bounds = array<i64: 4>, scalar_prefetch = 0 : i64, scratch_operands = 0 : i64, tpu.core_type = #tpu.core_type<tc>, window_params = [{transform_indices = @transform_0, window_bounds = array<i64: 512, 130>}, {pipeline_mode = #tpu.pipeline_mode<synchronous>, transform_indices = @transform_1, window_bounds = array<i64: 130, 256>}, {pipeline_mode = #tpu.pipeline_mode<synchronous>, transform_indices = @transform_2, window_bounds = array<i64: 256, 128>}, {pipeline_mode = #tpu.pipeline_mode<synchronous>, transform_indices = @transform_3, window_bounds = array<i64: 128, 128>}, {pipeline_mode = #tpu.pipeline_mode<synchronous>, transform_indices = @transform_4, window_bounds = array<i64: 1, 256>}, {pipeline_mode = #tpu.pipeline_mode<synchronous>, transform_indices = @transform_5, window_bounds = array<i64: 1, 128>}, {pipeline_mode = #tpu.pipeline_mode<synchronous>, transform_indices = @transform_6, window_bounds = array<i64: 1, 128>}, {transform_indices = @transform_7, window_bounds = array<i64: 512, 128>}]} {
    %c0 = arith.constant 0 : index
    %c0_0 = arith.constant 0 : index
    %0 = vector.load %arg1[%c0, %c0_0] : memref<512x130xbf16, #tpu.memory_space<vmem>>, vector<512x130xbf16>
    %c0_1 = arith.constant 0 : index
    %c0_2 = arith.constant 0 : index
    %1 = vector.load %arg2[%c0_1, %c0_2] : memref<130x256xbf16, #tpu.memory_space<vmem>>, vector<130x256xbf16>
    %cst = arith.constant dense<0.000000e+00> : vector<512x256xf32>
    %2 = tpu.matmul %0, %1, %cst {dimension_numbers = #tpu.dot_dimension_numbers<[1], [0], [0], [1], [0, 0, 1, 1], [], []>} : vector<512x130xbf16>, vector<130x256xbf16>, vector<512x256xf32> -> vector<512x256xf32>
    %c0_3 = arith.constant 0 : index
    %c0_4 = arith.constant 0 : index
    %3 = vector.load %arg5[%c0_3, %c0_4] : memref<1x256xf32, #tpu.memory_space<vmem>>, vector<1x256xf32>
    %4 = vector.broadcast %3 : vector<1x256xf32> to vector<512x256xf32>
    %5 = arith.addf %2, %4 : vector<512x256xf32>
    %cst_5 = arith.constant 0.000000e+00 : f32
    %6 = vector.broadcast %cst_5 : f32 to vector<512x256xf32>
    %7 = arith.maximumf %5, %6 : vector<512x256xf32>
    %8 = arith.truncf %7 : vector<512x256xf32> to vector<512x256xbf16>
    %c0_6 = arith.constant 0 : index
    %c0_7 = arith.constant 0 : index
    %9 = vector.load %arg3[%c0_6, %c0_7] : memref<256x128xbf16, #tpu.memory_space<vmem>>, vector<256x128xbf16>
    %cst_8 = arith.constant dense<0.000000e+00> : vector<512x128xf32>
    %10 = tpu.matmul %8, %9, %cst_8 {dimension_numbers = #tpu.dot_dimension_numbers<[1], [0], [0], [1], [0, 0, 1, 1], [], []>} : vector<512x256xbf16>, vector<256x128xbf16>, vector<512x128xf32> -> vector<512x128xf32>
    %c0_9 = arith.constant 0 : index
    %c0_10 = arith.constant 0 : index
    %11 = vector.load %arg6[%c0_9, %c0_10] : memref<1x128xf32, #tpu.memory_space<vmem>>, vector<1x128xf32>
    %12 = vector.broadcast %11 : vector<1x128xf32> to vector<512x128xf32>
    %13 = arith.addf %10, %12 : vector<512x128xf32>
    %cst_11 = arith.constant 0.000000e+00 : f32
    %14 = vector.broadcast %cst_11 : f32 to vector<512x128xf32>
    %15 = arith.maximumf %13, %14 : vector<512x128xf32>
    %16 = arith.truncf %15 : vector<512x128xf32> to vector<512x128xbf16>
    %c0_12 = arith.constant 0 : index
    %c0_13 = arith.constant 0 : index
    %17 = vector.load %arg4[%c0_12, %c0_13] : memref<128x128xbf16, #tpu.memory_space<vmem>>, vector<128x128xbf16>
    %cst_14 = arith.constant dense<0.000000e+00> : vector<512x128xf32>
    %18 = tpu.matmul %16, %17, %cst_14 {dimension_numbers = #tpu.dot_dimension_numbers<[1], [0], [0], [1], [0, 0, 1, 1], [], []>} : vector<512x128xbf16>, vector<128x128xbf16>, vector<512x128xf32> -> vector<512x128xf32>
    %c0_15 = arith.constant 0 : index
    %c0_16 = arith.constant 0 : index
    %19 = vector.load %arg7[%c0_15, %c0_16] : memref<1x128xf32, #tpu.memory_space<vmem>>, vector<1x128xf32>
    %20 = vector.broadcast %19 : vector<1x128xf32> to vector<512x128xf32>
    %21 = arith.addf %18, %20 : vector<512x128xf32>
    %c0_17 = arith.constant 0 : index
    %c0_18 = arith.constant 0 : index
    %22 = vector.load %arg8[%c0_17, %c0_18] : memref<512x128xf32, #tpu.memory_space<vmem>>, vector<512x128xf32>
    tpu.vector_store %arg8[%c0_17, %c0_18], %21 {strides = array<i32>} : memref<512x128xf32, #tpu.memory_space<vmem>>, vector<512x128xf32>,
    return
  }
  func.func @transform_0(%arg0: i32) -> (i32, i32) {
    %c0_i32 = arith.constant 0 : i32
    %c0_i32_0 = arith.constant 0 : i32
    return %arg0, %c0_i32 : i32, i32
  }
  func.func @transform_1(%arg0: i32) -> (i32, i32) {
    %c0_i32 = arith.constant 0 : i32
    %c0_i32_0 = arith.constant 0 : i32
    %c0_i32_1 = arith.constant 0 : i32
    return %c0_i32, %c0_i32_0 : i32, i32
  }
  func.func @transform_2(%arg0: i32) -> (i32, i32) {
    %c0_i32 = arith.constant 0 : i32
    %c0_i32_0 = arith.constant 0 : i32
    %c0_i32_1 = arith.constant 0 : i32
    return %c0_i32, %c0_i32_0 : i32, i32
  }
  func.func @transform_3(%arg0: i32) -> (i32, i32) {
    %c0_i32 = arith.constant 0 : i32
    %c0_i32_0 = arith.constant 0 : i32
    %c0_i32_1 = arith.constant 0 : i32
    return %c0_i32, %c0_i32_0 : i32, i32
  }
  func.func @transform_4(%arg0: i32) -> (i32, i32) {
    %c0_i32 = arith.constant 0 : i32
    %c0_i32_0 = arith.constant 0 : i32
    %c0_i32_1 = arith.constant 0 : i32
    return %c0_i32, %c0_i32_0 : i32, i32
  }
  func.func @transform_5(%arg0: i32) -> (i32, i32) {
    %c0_i32 = arith.constant 0 : i32
    %c0_i32_0 = arith.constant 0 : i32
    %c0_i32_1 = arith.constant 0 : i32
    return %c0_i32, %c0_i32_0 : i32, i32
  }
  func.func @transform_6(%arg0: i32) -> (i32, i32) {
    %c0_i32 = arith.constant 0 : i32
    %c0_i32_0 = arith.constant 0 : i32
    %c0_i32_1 = arith.constant 0 : i32
    return %c0_i32, %c0_i32_0 : i32, i32
  }
  func.func @transform_7(%arg0: i32) -> (i32, i32) {
    %c0_i32 = arith.constant 0 : i32
    %c0_i32_0 = arith.constant 0 : i32
    return %arg0, %c0_i32 : i32, i32
  }
}

</mosaic_0001>

<llo_original>
// kernel: mlp_forward.1
$region0: #{mlp_forward.1}
  #allocation0 [shape = 'u32[]', space=smem, size = 0x4, offset = 0x4, fixed_abs, tag = 'smem constant byte address 0x4 - core index']
  #allocation1 [shape = 'u32[144,128]{1,0:T(1,128)}', space=vmem, size = 0x12000, scoped, tag = 'internal scratch']
  %s0 = inlined_call_operand.vmem [shape: bf16[2048,130], index: 0, kind: input, shape index: {}]
  %s1 = inlined_call_operand.vmem [shape: bf16[130,256], index: 1, kind: input, shape index: {}]
  %s2 = inlined_call_operand.vmem [shape: bf16[256,128], index: 2, kind: input, shape index: {}]
  %s3 = inlined_call_operand.vmem [shape: bf16[128,128], index: 3, kind: input, shape index: {}]
  %s4 = inlined_call_operand.vmem [shape: f32[1,256], index: 4, kind: input, shape index: {}]
  %s5 = inlined_call_operand.vmem [shape: f32[1,128], index: 5, kind: input, shape index: {}]
  %s6 = inlined_call_operand.vmem [shape: f32[1,128], index: 6, kind: input, shape index: {}]
  %s7 = inlined_call_operand.vmem [shape: f32[2048,128], index: 7, kind: output, shape index: {}]
  %s8 = sld [smem:[#allocation0]]
  $region61: #{mlp_forward.1} parent=0
    _
  %s10 = ssub.s32 1, %s8
  %s11 = scalar_select 0, %s10, %s8
  loop: start=0, step=1, limit=6
  $region2: #{mlp_forward.1} parent=0 // loop_pre_header
    _
  $region3: #{mlp_forward.1} parent=0 // loop_header
    %s13 = sphi 0, %s17
    %p14 = scmp.ge.s32.totalorder %s13, 6
    %s23 = sphi 0, %s25
    %s26 = sphi 0, %s23
    %s27 = sphi 0, %s26
    %s43 = sphi 0, %s27
    %s47 = sphi 0, %s47
    %s49 = sphi 0, %s47
    %s50 = sphi 0, %s49
    %s64 = sphi 0, %s50
    %s68 = sphi 0, %s68
    %s70 = sphi 0, %s68
    %s71 = sphi 0, %s70
    %s85 = sphi 0, %s71
    %s89 = sphi 0, %s89
    %s91 = sphi 0, %s89
    %s92 = sphi 0, %s91
    %s106 = sphi 0, %s92
    %s110 = sphi 0, %s110
    %s112 = sphi 0, %s110
    %s113 = sphi 0, %s112
    %s127 = sphi 0, %s113
    %s131 = sphi 0, %s131
    %s133 = sphi 0, %s131
    %s134 = sphi 0, %s133
    %s148 = sphi 0, %s134
    %s152 = sphi 0, %s152
    %s154 = sphi 0, %s152
    %s155 = sphi 0, %s154
    %s169 = sphi 0, %s155
    %s175 = sphi 0, %s177
    %s178 = sphi 0, %s175
    %s179 = sphi 0, %s178
    %s195 = sphi 0, %s179
  $region4: #{mlp_forward.1} parent=0 // loop_header_branch
    %16 = sbr.rel (%p14) target = $region8
  $region5: #{mlp_forward.1} parent=0 // loop_body
    %s18 = ssub.s32 %s13, 1
    %s19 = ssub.s32 %s13, 2
    %s20 = sadd.s32 %s13, 1
    %s21 = ssub.s32 %s13, %s20
    %p22 = scmp.eq.s32.totalorder %s21, 0
    %s24 = sadd.s32 %s23, 1
    %s25 = scalar_select %p22, %s23, %s24
    %p28 = pneg %p22
    %p29 = scmp.eq.s32.totalorder %s13, 3
    %p30 = por %p28, %p29
    %p31 = scmp.ne.s32.totalorder %s23, %s26
    %p32 = scmp.eq.s32.totalorder %s13, 0
    %p33 = por %p31, %p32
    %p34 = scmp.ne.s32.totalorder %s23, %s26
    %p35 = scmp.eq.s32.totalorder %s18, 3
    %p36 = por %p34, %p35
    %p37 = scmp.ne.s32.totalorder %s26, %s27
    %p38 = scmp.eq.s32.totalorder %s18, 0
    %p39 = por %p37, %p38
    %p40 = scmp.ne.s32.totalorder %s26, %s27
    %p41 = scmp.eq.s32.totalorder %s19, 3
    %p42 = por %p40, %p41
    %p44 = scmp.ne.s32.totalorder %s27, %s43
    %p45 = scmp.eq.s32.totalorder %s19, 0
    %p46 = por %p44, %p45
    %s48 = sadd.s32 %s47, 1
    %p51 = scmp.eq.s32.totalorder %s13, 3
    %p52 = scmp.ne.s32.totalorder %s47, %s49
    %p53 = scmp.eq.s32.totalorder %s13, 0
    %p54 = por %p52, %p53
    %p55 = scmp.ne.s32.totalorder %s47, %s49
    %p56 = scmp.eq.s32.totalorder %s18, 3
    %p57 = por %p55, %p56
    %p58 = scmp.ne.s32.totalorder %s49, %s50
    %p59 = scmp.eq.s32.totalorder %s18, 0
    %p60 = por %p58, %p59
    %p61 = scmp.ne.s32.totalorder %s49, %s50
    %p62 = scmp.eq.s32.totalorder %s19, 3
    %p63 = por %p61, %p62
    %p65 = scmp.ne.s32.totalorder %s50, %s64
    %p66 = scmp.eq.s32.totalorder %s19, 0
    %p67 = por %p65, %p66
    %s69 = sadd.s32 %s68, 1
    %p72 = scmp.eq.s32.totalorder %s13, 3
    %p73 = scmp.ne.s32.totalorder %s68, %s70
    %p74 = scmp.eq.s32.totalorder %s13, 0
    %p75 = por %p73, %p74
    %p76 = scmp.ne.s32.totalorder %s68, %s70
    %p77 = scmp.eq.s32.totalorder %s18, 3
    %p78 = por %p76, %p77
    %p79 = scmp.ne.s32.totalorder %s70, %s71
    %p80 = scmp.eq.s32.totalorder %s18, 0
    %p81 = por %p79, %p80
    %p82 = scmp.ne.s32.totalorder %s70, %s71
    %p83 = scmp.eq.s32.totalorder %s19, 3
    %p84 = por %p82, %p83
    %p86 = scmp.ne.s32.totalorder %s71, %s85
    %p87 = scmp.eq.s32.totalorder %s19, 0
    %p88 = por %p86, %p87
    %s90 = sadd.s32 %s89, 1
    %p93 = scmp.eq.s32.totalorder %s13, 3
    %p94 = scmp.ne.s32.totalorder %s89, %s91
    %p95 = scmp.eq.s32.totalorder %s13, 0
    %p96 = por %p94, %p95
    %p97 = scmp.ne.s32.totalorder %s89, %s91
    %p98 = scmp.eq.s32.totalorder %s18, 3
    %p99 = por %p97, %p98
    %p100 = scmp.ne.s32.totalorder %s91, %s92
    %p101 = scmp.eq.s32.totalorder %s18, 0
    %p102 = por %p100, %p101
    %p103 = scmp.ne.s32.totalorder %s91, %s92
    %p104 = scmp.eq.s32.totalorder %s19, 3
    %p105 = por %p103, %p104
    %p107 = scmp.ne.s32.totalorder %s92, %s106
    %p108 = scmp.eq.s32.totalorder %s19, 0
    %p109 = por %p107, %p108
    %s111 = sadd.s32 %s110, 1
    %p114 = scmp.eq.s32.totalorder %s13, 3
    %p115 = scmp.ne.s32.totalorder %s110, %s112
    %p116 = scmp.eq.s32.totalorder %s13, 0
    %p117 = por %p115, %p116
    %p118 = scmp.ne.s32.totalorder %s110, %s112
    %p119 = scmp.eq.s32.totalorder %s18, 3
    %p120 = por %p118, %p119
    %p121 = scmp.ne.s32.totalorder %s112, %s113
    %p122 = scmp.eq.s32.totalorder %s18, 0
    %p123 = por %p121, %p122
    %p124 = scmp.ne.s32.totalorder %s112, %s113
    %p125 = scmp.eq.s32.totalorder %s19, 3
    %p126 = por %p124, %p125
    %p128 = scmp.ne.s32.totalorder %s113, %s127
    %p129 = scmp.eq.s32.totalorder %s19, 0
    %p130 = por %p128, %p129
    %s132 = sadd.s32 %s131, 1
    %p135 = scmp.eq.s32.totalorder %s13, 3
    %p136 = scmp.ne.s32.totalorder %s131, %s133
    %p137 = scmp.eq.s32.totalorder %s13, 0
    %p138 = por %p136, %p137
    %p139 = scmp.ne.s32.totalorder %s131, %s133
    %p140 = scmp.eq.s32.totalorder %s18, 3
    %p141 = por %p139, %p140
    %p142 = scmp.ne.s32.totalorder %s133, %s134
    %p143 = scmp.eq.s32.totalorder %s18, 0
    %p144 = por %p142, %p143
    %p145 = scmp.ne.s32.totalorder %s133, %s134
    %p146 = scmp.eq.s32.totalorder %s19, 3
    %p147 = por %p145, %p146
    %p149 = scmp.ne.s32.totalorder %s134, %s148
    %p150 = scmp.eq.s32.totalorder %s19, 0
    %p151 = por %p149, %p150
    %s153 = sadd.s32 %s152, 1
    %p156 = scmp.eq.s32.totalorder %s13, 3
    %p157 = scmp.ne.s32.totalorder %s152, %s154
    %p158 = scmp.eq.s32.totalorder %s13, 0
    %p159 = por %p157, %p158
    %p160 = scmp.ne.s32.totalorder %s152, %s154
    %p161 = scmp.eq.s32.totalorder %s18, 3
    %p162 = por %p160, %p161
    %p163 = scmp.ne.s32.totalorder %s154, %s155
    %p164 = scmp.eq.s32.totalorder %s18, 0
    %p165 = por %p163, %p164
    %p166 = scmp.ne.s32.totalorder %s154, %s155
    %p167 = scmp.eq.s32.totalorder %s19, 3
    %p168 = por %p166, %p167
    %p170 = scmp.ne.s32.totalorder %s155, %s169
    %p171 = scmp.eq.s32.totalorder %s19, 0
    %p172 = por %p170, %p171
    %s173 = ssub.s32 %s13, %s20
    %p174 = scmp.eq.s32.totalorder %s173, 0
    %s176 = sadd.s32 %s175, 1
    %s177 = scalar_select %p174, %s175, %s176
    %p180 = pneg %p174
    %p181 = scmp.eq.s32.totalorder %s13, 3
    %p182 = por %p180, %p181
    %p183 = scmp.ne.s32.totalorder %s175, %s178
    %p184 = scmp.eq.s32.totalorder %s13, 0
    %p185 = por %p183, %p184
    %p186 = scmp.ne.s32.totalorder %s175, %s178
    %p187 = scmp.eq.s32.totalorder %s18, 3
    %p188 = por %p186, %p187
    %p189 = scmp.ne.s32.totalorder %s178, %s179
    %p190 = scmp.eq.s32.totalorder %s18, 0
    %p191 = por %p189, %p190
    %p192 = scmp.ne.s32.totalorder %s178, %s179
    %p193 = scmp.eq.s32.totalorder %s19, 3
    %p194 = por %p192, %p193
    %p196 = scmp.ne.s32.totalorder %s179, %s195
    %p197 = scmp.eq.s32.totalorder %s19, 0
    %p198 = por %p196, %p197
    %p199 = scmp.le.s32.totalorder 1, %s13
    %p200 = scmp.lt.s32.totalorder %s13, 5
    %p201 = pnand %p199, %p200
    %p202 = pneg %p201
    // Predicated region
    $region9: #{mlp_forward.1} parent=5 // pred_check
      _
    $region10: #{mlp_forward.1} parent=5 // pred_check_branch
      %204 = sbr.rel (%p201) target = $region12
    $region11: #{mlp_forward.1} parent=5 // pred_region
      %s205 = ssub.s32 %s13, 1
      // Predicated region
      $region13: #{mlp_forward.1} parent=11 // pred_check
        %p206 = pneg %p60
      $region14: #{mlp_forward.1} parent=11 // pred_check_branch
        %208 = sbr.rel (%p206) target = $region16
      $region15: #{mlp_forward.1} parent=11 // pred_region
        _
      $region16: #{mlp_forward.1} parent=11 // pred_fallthru
        _
      // Predicated region
      $region17: #{mlp_forward.1} parent=11 // pred_check
        %p209 = pneg %p81
      $region18: #{mlp_forward.1} parent=11 // pred_check_branch
        %211 = sbr.rel (%p209) target = $region20
      $region19: #{mlp_forward.1} parent=11 // pred_region
        _
      $region20: #{mlp_forward.1} parent=11 // pred_fallthru
        _
      // Predicated region
      $region21: #{mlp_forward.1} parent=11 // pred_check
        %p212 = pneg %p102
      $region22: #{mlp_forward.1} parent=11 // pred_check_branch
        %214 = sbr.rel (%p212) target = $region24
      $region23: #{mlp_forward.1} parent=11 // pred_region
        _
      $region24: #{mlp_forward.1} parent=11 // pred_fallthru
        _
      // Predicated region
      $region25: #{mlp_forward.1} parent=11 // pred_check
        %p215 = pneg %p123
      $region26: #{mlp_forward.1} parent=11 // pred_check_branch
        %217 = sbr.rel (%p215) target = $region28
      $region27: #{mlp_forward.1} parent=11 // pred_region
        _
      $region28: #{mlp_forward.1} parent=11 // pred_fallthru
        _
      // Predicated region
      $region29: #{mlp_forward.1} parent=11 // pred_check
        %p218 = pneg %p144
      $region30: #{mlp_forward.1} parent=11 // pred_check_branch
        %220 = sbr.rel (%p218) target = $region32
      $region31: #{mlp_forward.1} parent=11 // pred_region
        _
      $region32: #{mlp_forward.1} parent=11 // pred_fallthru
        _
      // Predicated region
      $region33: #{mlp_forward.1} parent=11 // pred_check
        %p221 = pneg %p165
      $region34: #{mlp_forward.1} parent=11 // pred_check_branch
        %223 = sbr.rel (%p221) target = $region36
      $region35: #{mlp_forward.1} parent=11 // pred_region
        _
      $region36: #{mlp_forward.1} parent=11 // pred_fallthru
        _
    $region12: #{mlp_forward.1} parent=5 // pred_fallthru
      _
    %p224 = scmp.lt.s32.totalorder %s13, 4
    // Predicated region
    $region37: #{mlp_forward.1} parent=5 // pred_check
      %p225 = pneg %p224
    $region38: #{mlp_forward.1} parent=5 // pred_check_branch
      %227 = sbr.rel (%p225) target = $region40
    $region39: #{mlp_forward.1} parent=5 // pred_region
      // Predicated region
      $region41: #{mlp_forward.1} parent=39 // pred_check
        %p228 = pneg %p33
      $region42: #{mlp_forward.1} parent=39 // pred_check_branch
        %230 = sbr.rel (%p228) target = $region44
      $region43: #{mlp_forward.1} parent=39 // pred_region
        %s231 = smul.u32 64, %s13
        %p232 = scmp.lt.s32.totalorder %s231, 255
        %s233 = scalar_select %p232, %s231, 255
        %s234 = smul.addr %s233, 2
        %s235 = smul.addr %s234, 4
        %s236 = scalar_lea.vmem %s0, %s235
        %s237 = smul.u32 64, %s13
      $region44: #{mlp_forward.1} parent=39 // pred_fallthru
        _
    $region40: #{mlp_forward.1} parent=5 // pred_fallthru
      _
    %p238 = scmp.le.s32.totalorder 1, %s13
    %p239 = scmp.lt.s32.totalorder %s13, 5
    %p240 = pnand %p238, %p239
    %p241 = pneg %p240
    // Predicated region
    $region45: #{mlp_forward.1} parent=5 // pred_check
      _
    $region46: #{mlp_forward.1} parent=5 // pred_check_branch
      %243 = sbr.rel (%p240) target = $region48
    $region47: #{mlp_forward.1} parent=5 // pred_region
      %s244 = ssub.s32 %s13, 1
      %s245 = smul.u32 64, %s18
      %p246 = scmp.lt.s32.totalorder %s245, 255
      %s247 = scalar_select %p246, %s245, 255
      %s248 = smul.addr %s247, 2
      %s249 = smul.addr %s248, 4
      %s250 = scalar_lea.vmem %s0, %s249
      %p251 = pneg %p39
      %p252 = pneg %p36
      %p253 = pneg %p60
      %p254 = pneg %p57
      %p255 = pneg %p81
      %p256 = pneg %p78
      %p257 = pneg %p102
      %p258 = pneg %p99
      %p259 = pneg %p123
      %p260 = pneg %p120
      %p261 = pneg %p144
      %p262 = pneg %p141
      %p263 = pneg %p165
      %p264 = pneg %p162
      %p265 = pneg %p191
      %p266 = pneg %p188
      %s267 = smul.u32 64, %s18
      %p268 = scmp.lt.s32.totalorder %s267, 255
      %s269 = scalar_select %p268, %s267, 255
      %s270 = smul.addr %s269, 8
      %s271 = scalar_lea.vmem %s7, %s270
      %s272 = smul.u32 64, %s18
      %p273 = scmp.lt.s32.totalorder %s272, 255
      %s274 = scalar_select %p273, %s272, 255
      %s275 = smul.addr %s274, 2
      %s276 = smul.addr %s275, 4
      %s277 = scalar_lea.vmem %s0, %s276
      %s278 = smul.u32 64, %s18
      %s279 = smul.u32 64, %s18
      %p280 = scmp.lt.s32.totalorder %s279, 255
      %s281 = scalar_select %p280, %s279, 255
      %s282 = smul.addr %s281, 8
      %s283 = scalar_lea.vmem %s7, %s282
      %s284 = smul.u32 64, %s18
      %v286 = vld [vmem:[%s277] sm:$0xff]
      %v287 = vld [vmem:[%s277 + $0x8] sm:$0xff]
      %v288 = vld [vmem:[%s277 + $0x10] sm:$0xff]
      %v289 = vld [vmem:[%s277 + $0x18] sm:$0xff]
      %v290 = vld [vmem:[%s277 + $0x20] sm:$0xff]
      %v291 = vld [vmem:[%s277 + $0x28] sm:$0xff]
      %v292 = vld [vmem:[%s277 + $0x30] sm:$0xff]
      %v293 = vld [vmem:[%s277 + $0x38] sm:$0xff]
      %v294 = vld [vmem:[%s277 + $0x40] sm:$0xff]
      %v295 = vld [vmem:[%s277 + $0x48] sm:$0xff]
      %v296 = vld [vmem:[%s277 + $0x50] sm:$0xff]
      %v297 = vld [vmem:[%s277 + $0x58] sm:$0xff]
      %v298 = vld [vmem:[%s277 + $0x60] sm:$0xff]
      %v299 = vld [vmem:[%s277 + $0x68] sm:$0xff]
      %v300 = vld [vmem:[%s277 + $0x70] sm:$0xff]
      %v301 = vld [vmem:[%s277 + $0x78] sm:$0xff]
      %v302 = vld [vmem:[%s277 + $0x80] sm:$0xff]
      %v303 = vld [vmem:[%s277 + $0x88] sm:$0xff]
      %v304 = vld [vmem:[%s277 + $0x90] sm:$0xff]
      %v305 = vld [vmem:[%s277 + $0x98] sm:$0xff]
      %v306 = vld [vmem:[%s277 + $0xa0] sm:$0xff]
      %v307 = vld [vmem:[%s277 + $0xa8] sm:$0xff]
      %v308 = vld [vmem:[%s277 + $0xb0] sm:$0xff]
      %v309 = vld [vmem:[%s277 + $0xb8] sm:$0xff]
      %v310 = vld [vmem:[%s277 + $0xc0] sm:$0xff]
      %v311 = vld [vmem:[%s277 + $0xc8] sm:$0xff]
      %v312 = vld [vmem:[%s277 + $0xd0] sm:$0xff]
      %v313 = vld [vmem:[%s277 + $0xd8] sm:$0xff]
      %v314 = vld [vmem:[%s277 + $0xe0] sm:$0xff]
      %v315 = vld [vmem:[%s277 + $0xe8] sm:$0xff]
      %v316 = vld [vmem:[%s277 + $0xf0] sm:$0xff]
      %v317 = vld [vmem:[%s277 + $0xf8] sm:$0xff]
      %v318 = vld [vmem:[%s277 + $0x100] sm:$0xff]
      %v319 = vld [vmem:[%s277 + $0x108] sm:$0xff]
      %v320 = vld [vmem:[%s277 + $0x110] sm:$0xff]
      %v321 = vld [vmem:[%s277 + $0x118] sm:$0xff]
      %v322 = vld [vmem:[%s277 + $0x120] sm:$0xff]
      %v323 = vld [vmem:[%s277 + $0x128] sm:$0xff]
      %v324 = vld [vmem:[%s277 + $0x130] sm:$0xff]
      %v325 = vld [vmem:[%s277 + $0x138] sm:$0xff]
      %v326 = vld [vmem:[%s277 + $0x140] sm:$0xff]
      %v327 = vld [vmem:[%s277 + $0x148] sm:$0xff]
      %v328 = vld [vmem:[%s277 + $0x150] sm:$0xff]
      %v329 = vld [vmem:[%s277 + $0x158] sm:$0xff]
      %v330 = vld [vmem:[%s277 + $0x160] sm:$0xff]
      %v331 = vld [vmem:[%s277 + $0x168] sm:$0xff]
      %v332 = vld [vmem:[%s277 + $0x170] sm:$0xff]
      %v333 = vld [vmem:[%s277 + $0x178] sm:$0xff]
      %v334 = vld [vmem:[%s277 + $0x180] sm:$0xff]
      %v335 = vld [vmem:[%s277 + $0x188] sm:$0xff]
      %v336 = vld [vmem:[%s277 + $0x190] sm:$0xff]
      %v337 = vld [vmem:[%s277 + $0x198] sm:$0xff]
      %v338 = vld [vmem:[%s277 + $0x1a0] sm:$0xff]
      %v339 = vld [vmem:[%s277 + $0x1a8] sm:$0xff]
      %v340 = vld [vmem:[%s277 + $0x1b0] sm:$0xff]
      %v341 = vld [vmem:[%s277 + $0x1b8] sm:$0xff]
      %v342 = vld [vmem:[%s277 + $0x1c0] sm:$0xff]
      %v343 = vld [vmem:[%s277 + $0x1c8] sm:$0xff]
      %v344 = vld [vmem:[%s277 + $0x1d0] sm:$0xff]
      %v345 = vld [vmem:[%s277 + $0x1d8] sm:$0xff]
      %v346 = vld [vmem:[%s277 + $0x1e0] sm:$0xff]
      %v347 = vld [vmem:[%s277 + $0x1e8] sm:$0xff]
      %v348 = vld [vmem:[%s277 + $0x1f0] sm:$0xff]
      %v349 = vld [vmem:[%s277 + $0x1f8] sm:$0xff]
      %v350 = vld [vmem:[%s1] sm:$0xff]
      %v351 = vld [vmem:[%s1 + $0x8] sm:$0xff]
      %v352 = vld [vmem:[%s1 + $0x10] sm:$0xff]
      %v353 = vld [vmem:[%s1 + $0x18] sm:$0xff]
      %v354 = vld [vmem:[%s1 + $0x20] sm:$0xff]
      %v355 = vld [vmem:[%s1 + $0x28] sm:$0xff]
      %v356 = vld [vmem:[%s1 + $0x30] sm:$0xff]
      %v357 = vld [vmem:[%s1 + $0x38] sm:$0xff]
      %v358 = vld [vmem:[%s1 + $0x40] sm:$0xff]
      %v359 = vld [vmem:[%s1 + $0x48] sm:$0xff]
      %v360 = vld [vmem:[%s1 + $0x50] sm:$0xff]
      %v361 = vld [vmem:[%s1 + $0x58] sm:$0xff]
      %v362 = vld [vmem:[%s1 + $0x60] sm:$0xff]
      %v363 = vld [vmem:[%s1 + $0x68] sm:$0xff]
      %v364 = vld [vmem:[%s1 + $0x70] sm:$0xff]
      %v365 = vld [vmem:[%s1 + $0x78] sm:$0xff]
      %v366 = vld [vmem:[%s1 + $0x80] sm:$0x11]
      %v367 = vld [vmem:[%s4] sm:$0x3]
      %v369 = vlaneseq
      %v370 = vshrl.u32 %v369, 7
      %v371 = vsub.s32 0, %v370
      %v372 = vrot.slane %v367, %v371
      %v373 = vlaneseq
      %v374 = vshrl.u32 %v373, 7
      %v375 = vsub.s32 1, %v374
      %v376 = vrot.slane %v367, %v375
      %v443 = vunpack.c.l.b16 %v286
      %v444 = vunpack.c.h.b16 %v286
      %v445 = vunpack.c.l.b16 %v287
      %v446 = vunpack.c.h.b16 %v287
      %v447 = vunpack.c.l.b16 %v288
      %v448 = vunpack.c.h.b16 %v288
      %v449 = vunpack.c.l.b16 %v289
      %v450 = vunpack.c.h.b16 %v289
      %v451 = vunpack.c.l.b16 %v290
      %v452 = vunpack.c.h.b16 %v290
      %v453 = vunpack.c.l.b16 %v291
      %v454 = vunpack.c.h.b16 %v291
      %v455 = vunpack.c.l.b16 %v292
      %v456 = vunpack.c.h.b16 %v292
      %v457 = vunpack.c.l.b16 %v293
      %v458 = vunpack.c.h.b16 %v293
      %v459 = vunpack.c.l.b16 %v294
      %v460 = vunpack.c.h.b16 %v294
      %v461 = vunpack.c.l.b16 %v295
      %v462 = vunpack.c.h.b16 %v295
      %v463 = vunpack.c.l.b16 %v296
      %v464 = vunpack.c.h.b16 %v296
      %v465 = vunpack.c.l.b16 %v297
      %v466 = vunpack.c.h.b16 %v297
      %v467 = vunpack.c.l.b16 %v298
      %v468 = vunpack.c.h.b16 %v298
      %v469 = vunpack.c.l.b16 %v299
      %v470 = vunpack.c.h.b16 %v299
      %v471 = vunpack.c.l.b16 %v300
      %v472 = vunpack.c.h.b16 %v300
      %v473 = vunpack.c.l.b16 %v301
      %v474 = vunpack.c.h.b16 %v301
      %v475 = vunpack.c.l.b16 %v302
      %v476 = vunpack.c.h.b16 %v302
      %v477 = vunpack.c.l.b16 %v303
      %v478 = vunpack.c.h.b16 %v303
      %v479 = vunpack.c.l.b16 %v304
      %v480 = vunpack.c.h.b16 %v304
      %v481 = vunpack.c.l.b16 %v305
      %v482 = vunpack.c.h.b16 %v305
      %v483 = vunpack.c.l.b16 %v306
      %v484 = vunpack.c.h.b16 %v306
      %v485 = vunpack.c.l.b16 %v307
      %v486 = vunpack.c.h.b16 %v307
      %v487 = vunpack.c.l.b16 %v308
      %v488 = vunpack.c.h.b16 %v308
      %v489 = vunpack.c.l.b16 %v309
      %v490 = vunpack.c.h.b16 %v309
      %v491 = vunpack.c.l.b16 %v310
      %v492 = vunpack.c.h.b16 %v310
      %v493 = vunpack.c.l.b16 %v311
      %v494 = vunpack.c.h.b16 %v311
      %v495 = vunpack.c.l.b16 %v312
      %v496 = vunpack.c.h.b16 %v312
      %v497 = vunpack.c.l.b16 %v313
      %v498 = vunpack.c.h.b16 %v313
      %v499 = vunpack.c.l.b16 %v314
      %v500 = vunpack.c.h.b16 %v314
      %v501 = vunpack.c.l.b16 %v315
      %v502 = vunpack.c.h.b16 %v315
      %v503 = vunpack.c.l.b16 %v316
      %v504 = vunpack.c.h.b16 %v316
      %v505 = vunpack.c.l.b16 %v317
      %v506 = vunpack.c.h.b16 %v317
      %v507 = vunpack.c.l.b16 %v318
      %v508 = vunpack.c.h.b16 %v318
      %v509 = vunpack.c.l.b16 %v319
      %v510 = vunpack.c.h.b16 %v319
      %v511 = vunpack.c.l.b16 %v320
      %v512 = vunpack.c.h.b16 %v320
      %v513 = vunpack.c.l.b16 %v321
      %v514 = vunpack.c.h.b16 %v321
      %v515 = vunpack.c.l.b16 %v322
      %v516 = vunpack.c.h.b16 %v322
      %v517 = vunpack.c.l.b16 %v323
      %v518 = vunpack.c.h.b16 %v323
      %v519 = vunpack.c.l.b16 %v324
      %v520 = vunpack.c.h.b16 %v324
      %v521 = vunpack.c.l.b16 %v325
      %v522 = vunpack.c.h.b16 %v325
      %v523 = vunpack.c.l.b16 %v326
      %v524 = vunpack.c.h.b16 %v326
      %v525 = vunpack.c.l.b16 %v327
      %v526 = vunpack.c.h.b16 %v327
      %v527 = vunpack.c.l.b16 %v328
      %v528 = vunpack.c.h.b16 %v328
      %v529 = vunpack.c.l.b16 %v329
      %v530 = vunpack.c.h.b16 %v329
      %v531 = vunpack.c.l.b16 %v330
      %v532 = vunpack.c.h.b16 %v330
      %v533 = vunpack.c.l.b16 %v331
      %v534 = vunpack.c.h.b16 %v331
      %v535 = vunpack.c.l.b16 %v332
      %v536 = vunpack.c.h.b16 %v332
      %v537 = vunpack.c.l.b16 %v333
      %v538 = vunpack.c.h.b16 %v333
      %v539 = vunpack.c.l.b16 %v334
      %v540 = vunpack.c.h.b16 %v334
      %v541 = vunpack.c.l.b16 %v335
      %v542 = vunpack.c.h.b16 %v335
      %v543 = vunpack.c.l.b16 %v336
      %v544 = vunpack.c.h.b16 %v336
      %v545 = vunpack.c.l.b16 %v337
      %v546 = vunpack.c.h.b16 %v337
      %v547 = vunpack.c.l.b16 %v338
      %v548 = vunpack.c.h.b16 %v338
      %v549 = vunpack.c.l.b16 %v339
      %v550 = vunpack.c.h.b16 %v339
      %v551 = vunpack.c.l.b16 %v340
      %v552 = vunpack.c.h.b16 %v340
      %v553 = vunpack.c.l.b16 %v341
      %v554 = vunpack.c.h.b16 %v341
      %v555 = vunpack.c.l.b16 %v342
      %v556 = vunpack.c.h.b16 %v342
      %v557 = vunpack.c.l.b16 %v343
      %v558 = vunpack.c.h.b16 %v343
      %v559 = vunpack.c.l.b16 %v344
      %v560 = vunpack.c.h.b16 %v344
      %v561 = vunpack.c.l.b16 %v345
      %v562 = vunpack.c.h.b16 %v345
      %v563 = vunpack.c.l.b16 %v346
      %v564 = vunpack.c.h.b16 %v346
      %v565 = vunpack.c.l.b16 %v347
      %v566 = vunpack.c.h.b16 %v347
      %v567 = vunpack.c.l.b16 %v348
      %v568 = vunpack.c.h.b16 %v348
      %v569 = vunpack.c.l.b16 %v349
      %v570 = vunpack.c.h.b16 %v349
      %v571 = vpack.c.b16 %v445, %v443
      %v572 = vpack.c.b16 %v446, %v444
      %v573 = vpack.c.b16 %v449, %v447
      %v574 = vpack.c.b16 %v450, %v448
      %v575 = vpack.c.b16 %v453, %v451
      %v576 = vpack.c.b16 %v454, %v452
      %v577 = vpack.c.b16 %v457, %v455
      %v578 = vpack.c.b16 %v458, %v456
      %v579 = vpack.c.b16 %v461, %v459
      %v580 = vpack.c.b16 %v462, %v460
      %v581 = vpack.c.b16 %v465, %v463
      %v582 = vpack.c.b16 %v466, %v464
      %v583 = vpack.c.b16 %v469, %v467
      %v584 = vpack.c.b16 %v470, %v468
      %v585 = vpack.c.b16 %v473, %v471
      %v586 = vpack.c.b16 %v474, %v472
      %v587 = vpack.c.b16 %v477, %v475
      %v588 = vpack.c.b16 %v478, %v476
      %v589 = vpack.c.b16 %v481, %v479
      %v590 = vpack.c.b16 %v482, %v480
      %v591 = vpack.c.b16 %v485, %v483
      %v592 = vpack.c.b16 %v486, %v484
      %v593 = vpack.c.b16 %v489, %v487
      %v594 = vpack.c.b16 %v490, %v488
      %v595 = vpack.c.b16 %v493, %v491
      %v596 = vpack.c.b16 %v494, %v492
      %v597 = vpack.c.b16 %v497, %v495
      %v598 = vpack.c.b16 %v498, %v496
      %v599 = vpack.c.b16 %v501, %v499
      %v600 = vpack.c.b16 %v502, %v500
      %v601 = vpack.c.b16 %v505, %v503
      %v602 = vpack.c.b16 %v506, %v504
      %v603 = vpack.c.b16 %v509, %v507
      %v604 = vpack.c.b16 %v510, %v508
      %v605 = vpack.c.b16 %v513, %v511
      %v606 = vpack.c.b16 %v514, %v512
      %v607 = vpack.c.b16 %v517, %v515
      %v608 = vpack.c.b16 %v518, %v516
      %v609 = vpack.c.b16 %v521, %v519
      %v610 = vpack.c.b16 %v522, %v520
      %v611 = vpack.c.b16 %v525, %v523
      %v612 = vpack.c.b16 %v526, %v524
      %v613 = vpack.c.b16 %v529, %v527
      %v614 = vpack.c.b16 %v530, %v528
      %v615 = vpack.c.b16 %v533, %v531
      %v616 = vpack.c.b16 %v534, %v532
      %v617 = vpack.c.b16 %v537, %v535
      %v618 = vpack.c.b16 %v538, %v536
      %v619 = vpack.c.b16 %v541, %v539
      %v620 = vpack.c.b16 %v542, %v540
      %v621 = vpack.c.b16 %v545, %v543
      %v622 = vpack.c.b16 %v546, %v544
      %v623 = vpack.c.b16 %v549, %v547
      %v624 = vpack.c.b16 %v550, %v548
      %v625 = vpack.c.b16 %v553, %v551
      %v626 = vpack.c.b16 %v554, %v552
      %v627 = vpack.c.b16 %v557, %v555
      %v628 = vpack.c.b16 %v558, %v556
      %v629 = vpack.c.b16 %v561, %v559
      %v630 = vpack.c.b16 %v562, %v560
      %v631 = vpack.c.b16 %v565, %v563
      %v632 = vpack.c.b16 %v566, %v564
      %v633 = vpack.c.b16 %v569, %v567
      %v634 = vpack.c.b16 %v570, %v568
      %v684 = vunpack.c.l.b16 %v350
      %v685 = vunpack.c.h.b16 %v350
      %v686 = vunpack.c.l.b16 %v351
      %v687 = vunpack.c.h.b16 %v351
      %v688 = vunpack.c.l.b16 %v352
      %v689 = vunpack.c.h.b16 %v352
      %v690 = vunpack.c.l.b16 %v353
      %v691 = vunpack.c.h.b16 %v353
      %v692 = vunpack.c.l.b16 %v354
      %v693 = vunpack.c.h.b16 %v354
      %v694 = vunpack.c.l.b16 %v355
      %v695 = vunpack.c.h.b16 %v355
      %v696 = vunpack.c.l.b16 %v356
      %v697 = vunpack.c.h.b16 %v356
      %v698 = vunpack.c.l.b16 %v357
      %v699 = vunpack.c.h.b16 %v357
      %v700 = vunpack.c.l.b16 %v358
      %v701 = vunpack.c.h.b16 %v358
      %v702 = vunpack.c.l.b16 %v359
      %v703 = vunpack.c.h.b16 %v359
      %v704 = vunpack.c.l.b16 %v360
      %v705 = vunpack.c.h.b16 %v360
      %v706 = vunpack.c.l.b16 %v361
      %v707 = vunpack.c.h.b16 %v361
      %v708 = vunpack.c.l.b16 %v362
      %v709 = vunpack.c.h.b16 %v362
      %v710 = vunpack.c.l.b16 %v363
      %v711 = vunpack.c.h.b16 %v363
      %v712 = vunpack.c.l.b16 %v364
      %v713 = vunpack.c.h.b16 %v364
      %v714 = vunpack.c.l.b16 %v365
      %v715 = vunpack.c.h.b16 %v365
      %v716 = vunpack.c.l.b16 %v366
      %v717 = vunpack.c.h.b16 %v366
      %v718 = vpack.c.b16 %v686, %v684
      %v719 = vpack.c.b16 %v687, %v685
      %v720 = vpack.c.b16 %v690, %v688
      %v721 = vpack.c.b16 %v691, %v689
      %v722 = vpack.c.b16 %v694, %v692
      %v723 = vpack.c.b16 %v695, %v693
      %v724 = vpack.c.b16 %v698, %v696
      %v725 = vpack.c.b16 %v699, %v697
      %v726 = vpack.c.b16 %v702, %v700
      %v727 = vpack.c.b16 %v703, %v701
      %v728 = vpack.c.b16 %v706, %v704
      %v729 = vpack.c.b16 %v707, %v705
      %v730 = vpack.c.b16 %v710, %v708
      %v731 = vpack.c.b16 %v711, %v709
      %v732 = vpack.c.b16 %v714, %v712
      %v733 = vpack.c.b16 %v715, %v713
      %v734 = vpack.c.b16 %v716, %v716
      %v735 = vpack.c.b16 %v717, %v717
      %vm752 = vcmask 15360
      %v754 = vsel %vm752, %v572, 0
      %v757 = vsel %vm752, %v574, 0
      %v760 = vsel %vm752, %v576, 0
      %v763 = vsel %vm752, %v578, 0
      %v766 = vsel %vm752, %v580, 0
      %v769 = vsel %vm752, %v582, 0
      %v772 = vsel %vm752, %v584, 0
      %v775 = vsel %vm752, %v586, 0
      %v778 = vsel %vm752, %v588, 0
      %v781 = vsel %vm752, %v590, 0
      %v784 = vsel %vm752, %v592, 0
      %v787 = vsel %vm752, %v594, 0
      %v790 = vsel %vm752, %v596, 0
      %v793 = vsel %vm752, %v598, 0
      %v796 = vsel %vm752, %v600, 0
      %v799 = vsel %vm752, %v602, 0
      %v802 = vsel %vm752, %v604, 0
      %v805 = vsel %vm752, %v606, 0
      %v808 = vsel %vm752, %v608, 0
      %v811 = vsel %vm752, %v610, 0
      %v814 = vsel %vm752, %v612, 0
      %v817 = vsel %vm752, %v614, 0
      %v820 = vsel %vm752, %v616, 0
      %v823 = vsel %vm752, %v618, 0
      %v826 = vsel %vm752, %v620, 0
      %v829 = vsel %vm752, %v622, 0
      %v832 = vsel %vm752, %v624, 0
      %v835 = vsel %vm752, %v626, 0
      %v838 = vsel %vm752, %v628, 0
      %v841 = vsel %vm752, %v630, 0
      %v844 = vsel %vm752, %v632, 0
      %v847 = vsel %vm752, %v634, 0
      %vm849 = vcmask 1040384
      %v851 = vsel %vm849, %v734, 0
      %v854 = vsel %vm849, %v735, 0
      %856 = vmatprep.subr.bf16.mxu0 %v719
      %857 = vmatpush1.bf16.msra.mxu0 %v718
      %858 = vmatprep.subr.bf16.mxu0 %v721
      %859 = vmatpush1.bf16.msra.mxu0 %v720
      %860 = vmatprep.subr.bf16.mxu0 %v723
      %861 = vmatpush1.bf16.msra.mxu0 %v722
      %862 = vmatprep.subr.bf16.mxu0 %v725
      %863 = vmatpush1.bf16.msra.mxu0 %v724
      %864 = vmatprep.subr.bf16.mxu0 %v727
      %865 = vmatpush1.bf16.msra.mxu0 %v726
      %866 = vmatprep.subr.bf16.mxu0 %v729
      %867 = vmatpush1.bf16.msra.mxu0 %v728
      %868 = vmatprep.subr.bf16.mxu0 %v731
      %869 = vmatpush1.bf16.msra.mxu0 %v730
      %870 = vmatprep.subr.bf16.mxu0 %v733
      %871 = vmatpush1.bf16.msra.mxu0 %v732
      %872 = vmatprep.subr.bf16.mxu0 %v854
      %873 = vmatpush1.bf16.msra.mxu0 %v851
      %874 = vmatprep.subr.bf16.mxu0 0
      %875 = vmatpush1.bf16.msra.mxu0 0
      %876 = vmatprep.subr.bf16.mxu0 0
      %877 = vmatpush1.bf16.msra.mxu0 0
      %878 = vmatprep.subr.bf16.mxu0 0
      %879 = vmatpush1.bf16.msra.mxu0 0
      %880 = vmatprep.subr.bf16.mxu0 0
      %881 = vmatpush1.bf16.msra.mxu0 0
      %882 = vmatprep.subr.bf16.mxu0 0
      %883 = vmatpush1.bf16.msra.mxu0 0
      %884 = vmatprep.subr.bf16.mxu0 0
      %885 = vmatpush1.bf16.msra.mxu0 0
      %886 = vmatprep.subr.bf16.mxu0 0
      %887 = vmatpush1.bf16.msra.mxu0 0
      %888 = vmatprep.mubr.bf16.mxu0 %v754
      %889 = vmatmul.mubr.bf16.gmra.mrb[0].mxu0 %v571
      %v890 = vpop.f32.mrb[0].mxu0
      %v891 = vadd.f32 %v372, %v890
      %v892 = vpop.f32.mrb[0].mxu0
      %v893 = vadd.f32 %v376, %v892
      %v894 = vpop.f32.mrb[0].mxu0
      %v895 = vadd.f32 %v372, %v894
      %v896 = vpop.f32.mrb[0].mxu0
      %v897 = vadd.f32 %v376, %v896
      %898 = vmatprep.mubr.bf16.mxu0 %v757
      %899 = vmatmul.mubr.bf16.gmra.mrb[0].mxu0 %v573
      %v900 = vpop.f32.mrb[0].mxu0
      %v901 = vadd.f32 %v372, %v900
      %v902 = vpop.f32.mrb[0].mxu0
      %v903 = vadd.f32 %v376, %v902
      %v904 = vpop.f32.mrb[0].mxu0
      %v905 = vadd.f32 %v372, %v904
      %v906 = vpop.f32.mrb[0].mxu0
      %v907 = vadd.f32 %v376, %v906
      %908 = vmatprep.mubr.bf16.mxu0 %v760
      %909 = vmatmul.mubr.bf16.gmra.mrb[0].mxu0 %v575
      %v910 = vpop.f32.mrb[0].mxu0
      %v911 = vadd.f32 %v372, %v910
      %v912 = vpop.f32.mrb[0].mxu0
      %v913 = vadd.f32 %v376, %v912
      %v914 = vpop.f32.mrb[0].mxu0
      %v915 = vadd.f32 %v372, %v914
      %v916 = vpop.f32.mrb[0].mxu0
      %v917 = vadd.f32 %v376, %v916
      %918 = vmatprep.mubr.bf16.mxu0 %v763
      %919 = vmatmul.mubr.bf16.gmra.mrb[0].mxu0 %v577
      %v920 = vpop.f32.mrb[0].mxu0
      %v921 = vadd.f32 %v372, %v920
      %v922 = vpop.f32.mrb[0].mxu0
      %v923 = vadd.f32 %v376, %v922
      %v924 = vpop.f32.mrb[0].mxu0
      %v925 = vadd.f32 %v372, %v924
      %v926 = vpop.f32.mrb[0].mxu0
      %v927 = vadd.f32 %v376, %v926
      %928 = vmatprep.mubr.bf16.mxu0 %v766
      %929 = vmatmul.mubr.bf16.gmra.mrb[0].mxu0 %v579
      %v930 = vpop.f32.mrb[0].mxu0
      %v931 = vadd.f32 %v372, %v930
      %v932 = vpop.f32.mrb[0].mxu0
      %v933 = vadd.f32 %v376, %v932
      %v934 = vpop.f32.mrb[0].mxu0
      %v935 = vadd.f32 %v372, %v934
      %v936 = vpop.f32.mrb[0].mxu0
      %v937 = vadd.f32 %v376, %v936
      %938 = vmatprep.mubr.bf16.mxu0 %v769
      %939 = vmatmul.mubr.bf16.gmra.mrb[0].mxu0 %v581
      %v940 = vpop.f32.mrb[0].mxu0
      %v941 = vadd.f32 %v372, %v940
      %v942 = vpop.f32.mrb[0].mxu0
      %v943 = vadd.f32 %v376, %v942
      %v944 = vpop.f32.mrb[0].mxu0
      %v945 = vadd.f32 %v372, %v944
      %v946 = vpop.f32.mrb[0].mxu0
      %v947 = vadd.f32 %v376, %v946
      %948 = vmatprep.mubr.bf16.mxu0 %v772
      %949 = vmatmul.mubr.bf16.gmra.mrb[0].mxu0 %v583
      %v950 = vpop.f32.mrb[0].mxu0
      %v951 = vadd.f32 %v372, %v950
      %v952 = vpop.f32.mrb[0].mxu0
      %v953 = vadd.f32 %v376, %v952
      %v954 = vpop.f32.mrb[0].mxu0
      %v955 = vadd.f32 %v372, %v954
      %v956 = vpop.f32.mrb[0].mxu0
      %v957 = vadd.f32 %v376, %v956
      %958 = vmatprep.mubr.bf16.mxu0 %v775
      %959 = vmatmul.mubr.bf16.gmra.mrb[0].mxu0 %v585
      %v960 = vpop.f32.mrb[0].mxu0
      %v961 = vadd.f32 %v372, %v960
      %v962 = vpop.f32.mrb[0].mxu0
      %v963 = vadd.f32 %v376, %v962
      %v964 = vpop.f32.mrb[0].mxu0
      %v965 = vadd.f32 %v372, %v964
      %v966 = vpop.f32.mrb[0].mxu0
      %v967 = vadd.f32 %v376, %v966
      %968 = vmatprep.mubr.bf16.mxu0 %v778
      %969 = vmatmul.mubr.bf16.gmra.mrb[0].mxu0 %v587
      %v970 = vpop.f32.mrb[0].mxu0
      %v971 = vadd.f32 %v372, %v970
      %v972 = vpop.f32.mrb[0].mxu0
      %v973 = vadd.f32 %v376, %v972
      %v974 = vpop.f32.mrb[0].mxu0
      %v975 = vadd.f32 %v372, %v974
      %v976 = vpop.f32.mrb[0].mxu0
      %v977 = vadd.f32 %v376, %v976
      %978 = vmatprep.mubr.bf16.mxu0 %v781
      %979 = vmatmul.mubr.bf16.gmra.mrb[0].mxu0 %v589
      %v980 = vpop.f32.mrb[0].mxu0
      %v981 = vadd.f32 %v372, %v980
      %v982 = vpop.f32.mrb[0].mxu0
      %v983 = vadd.f32 %v376, %v982
      %v984 = vpop.f32.mrb[0].mxu0
      %v985 = vadd.f32 %v372, %v984
      %v986 = vpop.f32.mrb[0].mxu0
      %v987 = vadd.f32 %v376, %v986
      %988 = vmatprep.mubr.bf16.mxu0 %v784
      %989 = vmatmul.mubr.bf16.gmra.mrb[0].mxu0 %v591
      %v990 = vpop.f32.mrb[0].mxu0
      %v991 = vadd.f32 %v372, %v990
      %v992 = vpop.f32.mrb[0].mxu0
      %v993 = vadd.f32 %v376, %v992
      %v994 = vpop.f32.mrb[0].mxu0
      %v995 = vadd.f32 %v372, %v994
      %v996 = vpop.f32.mrb[0].mxu0
      %v997 = vadd.f32 %v376, %v996
      %998 = vmatprep.mubr.bf16.mxu0 %v787
      %999 = vmatmul.mubr.bf16.gmra.mrb[0].mxu0 %v593
      %v1000 = vpop.f32.mrb[0].mxu0
      %v1001 = vadd.f32 %v372, %v1000
      %v1002 = vpop.f32.mrb[0].mxu0
      %v1003 = vadd.f32 %v376, %v1002
      %v1004 = vpop.f32.mrb[0].mxu0
      %v1005 = vadd.f32 %v372, %v1004
      %v1006 = vpop.f32.mrb[0].mxu0
      %v1007 = vadd.f32 %v376, %v1006
      %1008 = vmatprep.mubr.bf16.mxu0 %v790
      %1009 = vmatmul.mubr.bf16.gmra.mrb[0].mxu0 %v595
      %v1010 = vpop.f32.mrb[0].mxu0
      %v1011 = vadd.f32 %v372, %v1010
      %v1012 = vpop.f32.mrb[0].mxu0
      %v1013 = vadd.f32 %v376, %v1012
      %v1014 = vpop.f32.mrb[0].mxu0
      %v1015 = vadd.f32 %v372, %v1014
      %v1016 = vpop.f32.mrb[0].mxu0
      %v1017 = vadd.f32 %v376, %v1016
      %1018 = vmatprep.mubr.bf16.mxu0 %v793
      %1019 = vmatmul.mubr.bf16.gmra.mrb[0].mxu0 %v597
      %v1020 = vpop.f32.mrb[0].mxu0
      %v1021 = vadd.f32 %v372, %v1020
      %v1022 = vpop.f32.mrb[0].mxu0
      %v1023 = vadd.f32 %v376, %v1022
      %v1024 = vpop.f32.mrb[0].mxu0
      %v1025 = vadd.f32 %v372, %v1024
      %v1026 = vpop.f32.mrb[0].mxu0
      %v1027 = vadd.f32 %v376, %v1026
      %1028 = vmatprep.mubr.bf16.mxu0 %v796
      %1029 = vmatmul.mubr.bf16.gmra.mrb[0].mxu0 %v599
      %v1030 = vpop.f32.mrb[0].mxu0
      %v1031 = vadd.f32 %v372, %v1030
      %v1032 = vpop.f32.mrb[0].mxu0
      %v1033 = vadd.f32 %v376, %v1032
      %v1034 = vpop.f32.mrb[0].mxu0
      %v1035 = vadd.f32 %v372, %v1034
      %v1036 = vpop.f32.mrb[0].mxu0
      %v1037 = vadd.f32 %v376, %v1036
      %1038 = vmatprep.mubr.bf16.mxu0 %v799
      %1039 = vmatmul.mubr.bf16.gmra.mrb[0].mxu0 %v601
      %v1040 = vpop.f32.mrb[0].mxu0
      %v1041 = vadd.f32 %v372, %v1040
      %v1042 = vpop.f32.mrb[0].mxu0
      %v1043 = vadd.f32 %v376, %v1042
      %v1044 = vpop.f32.mrb[0].mxu0
      %v1045 = vadd.f32 %v372, %v1044
      %v1046 = vpop.f32.mrb[0].mxu0
      %v1047 = vadd.f32 %v376, %v1046
      %1048 = vmatprep.mubr.bf16.mxu0 %v802
      %1049 = vmatmul.mubr.bf16.gmra.mrb[0].mxu0 %v603
      %v1050 = vpop.f32.mrb[0].mxu0
      %v1051 = vadd.f32 %v372, %v1050
      %v1052 = vpop.f32.mrb[0].mxu0
      %v1053 = vadd.f32 %v376, %v1052
      %v1054 = vpop.f32.mrb[0].mxu0
      %v1055 = vadd.f32 %v372, %v1054
      %v1056 = vpop.f32.mrb[0].mxu0
      %v1057 = vadd.f32 %v376, %v1056
      %1058 = vmatprep.mubr.bf16.mxu0 %v805
      %1059 = vmatmul.mubr.bf16.gmra.mrb[0].mxu0 %v605
      %v1060 = vpop.f32.mrb[0].mxu0
      %v1061 = vadd.f32 %v372, %v1060
      %v1062 = vpop.f32.mrb[0].mxu0
      %v1063 = vadd.f32 %v376, %v1062
      %v1064 = vpop.f32.mrb[0].mxu0
      %v1065 = vadd.f32 %v372, %v1064
      %v1066 = vpop.f32.mrb[0].mxu0
      %v1067 = vadd.f32 %v376, %v1066
      %1068 = vmatprep.mubr.bf16.mxu0 %v808
      %1069 = vmatmul.mubr.bf16.gmra.mrb[0].mxu0 %v607
      %v1070 = vpop.f32.mrb[0].mxu0
      %v1071 = vadd.f32 %v372, %v1070
      %v1072 = vpop.f32.mrb[0].mxu0
      %v1073 = vadd.f32 %v376, %v1072
      %v1074 = vpop.f32.mrb[0].mxu0
      %v1075 = vadd.f32 %v372, %v1074
      %v1076 = vpop.f32.mrb[0].mxu0
      %v1077 = vadd.f32 %v376, %v1076
      %1078 = vmatprep.mubr.bf16.mxu0 %v811
      %1079 = vmatmul.mubr.bf16.gmra.mrb[0].mxu0 %v609
      %v1080 = vpop.f32.mrb[0].mxu0
      %v1081 = vadd.f32 %v372, %v1080
      %v1082 = vpop.f32.mrb[0].mxu0
      %v1083 = vadd.f32 %v376, %v1082
      %v1084 = vpop.f32.mrb[0].mxu0
      %v1085 = vadd.f32 %v372, %v1084
      %v1086 = vpop.f32.mrb[0].mxu0
      %v1087 = vadd.f32 %v376, %v1086
      %1088 = vmatprep.mubr.bf16.mxu0 %v814
      %1089 = vmatmul.mubr.bf16.gmra.mrb[0].mxu0 %v611
      %v1090 = vpop.f32.mrb[0].mxu0
      %v1091 = vadd.f32 %v372, %v1090
      %v1092 = vpop.f32.mrb[0].mxu0
      %v1093 = vadd.f32 %v376, %v1092
      %v1094 = vpop.f32.mrb[0].mxu0
      %v1095 = vadd.f32 %v372, %v1094
      %v1096 = vpop.f32.mrb[0].mxu0
      %v1097 = vadd.f32 %v376, %v1096
      %1098 = vmatprep.mubr.bf16.mxu0 %v817
      %1099 = vmatmul.mubr.bf16.gmra.mrb[0].mxu0 %v613
      %v1100 = vpop.f32.mrb[0].mxu0
      %v1101 = vadd.f32 %v372, %v1100
      %v1102 = vpop.f32.mrb[0].mxu0
      %v1103 = vadd.f32 %v376, %v1102
      %v1104 = vpop.f32.mrb[0].mxu0
      %v1105 = vadd.f32 %v372, %v1104
      %v1106 = vpop.f32.mrb[0].mxu0
      %v1107 = vadd.f32 %v376, %v1106
      %1108 = vmatprep.mubr.bf16.mxu0 %v820
      %1109 = vmatmul.mubr.bf16.gmra.mrb[0].mxu0 %v615
      %v1110 = vpop.f32.mrb[0].mxu0
      %v1111 = vadd.f32 %v372, %v1110
      %v1112 = vpop.f32.mrb[0].mxu0
      %v1113 = vadd.f32 %v376, %v1112
      %v1114 = vpop.f32.mrb[0].mxu0
      %v1115 = vadd.f32 %v372, %v1114
      %v1116 = vpop.f32.mrb[0].mxu0
      %v1117 = vadd.f32 %v376, %v1116
      %1118 = vmatprep.mubr.bf16.mxu0 %v823
      %1119 = vmatmul.mubr.bf16.gmra.mrb[0].mxu0 %v617
      %v1120 = vpop.f32.mrb[0].mxu0
      %v1121 = vadd.f32 %v372, %v1120
      %v1122 = vpop.f32.mrb[0].mxu0
      %v1123 = vadd.f32 %v376, %v1122
      %v1124 = vpop.f32.mrb[0].mxu0
      %v1125 = vadd.f32 %v372, %v1124
      %v1126 = vpop.f32.mrb[0].mxu0
      %v1127 = vadd.f32 %v376, %v1126
      %1128 = vmatprep.mubr.bf16.mxu0 %v826
      %1129 = vmatmul.mubr.bf16.gmra.mrb[0].mxu0 %v619
      %v1130 = vpop.f32.mrb[0].mxu0
      %v1131 = vadd.f32 %v372, %v1130
      %v1132 = vpop.f32.mrb[0].mxu0
      %v1133 = vadd.f32 %v376, %v1132
      %v1134 = vpop.f32.mrb[0].mxu0
      %v1135 = vadd.f32 %v372, %v1134
      %v1136 = vpop.f32.mrb[0].mxu0
      %v1137 = vadd.f32 %v376, %v1136
      %1138 = vmatprep.mubr.bf16.mxu0 %v829
      %1139 = vmatmul.mubr.bf16.gmra.mrb[0].mxu0 %v621
      %v1140 = vpop.f32.mrb[0].mxu0
      %v1141 = vadd.f32 %v372, %v1140
      %v1142 = vpop.f32.mrb[0].mxu0
      %v1143 = vadd.f32 %v376, %v1142
      %v1144 = vpop.f32.mrb[0].mxu0
      %v1145 = vadd.f32 %v372, %v1144
      %v1146 = vpop.f32.mrb[0].mxu0
      %v1147 = vadd.f32 %v376, %v1146
      %1148 = vmatprep.mubr.bf16.mxu0 %v832
      %1149 = vmatmul.mubr.bf16.gmra.mrb[0].mxu0 %v623
      %v1150 = vpop.f32.mrb[0].mxu0
      %v1151 = vadd.f32 %v372, %v1150
      %v1152 = vpop.f32.mrb[0].mxu0
      %v1153 = vadd.f32 %v376, %v1152
      %v1154 = vpop.f32.mrb[0].mxu0
      %v1155 = vadd.f32 %v372, %v1154
      %v1156 = vpop.f32.mrb[0].mxu0
      %v1157 = vadd.f32 %v376, %v1156
      %1158 = vmatprep.mubr.bf16.mxu0 %v835
      %1159 = vmatmul.mubr.bf16.gmra.mrb[0].mxu0 %v625
      %v1160 = vpop.f32.mrb[0].mxu0
      %v1161 = vadd.f32 %v372, %v1160
      %v1162 = vpop.f32.mrb[0].mxu0
      %v1163 = vadd.f32 %v376, %v1162
      %v1164 = vpop.f32.mrb[0].mxu0
      %v1165 = vadd.f32 %v372, %v1164
      %v1166 = vpop.f32.mrb[0].mxu0
      %v1167 = vadd.f32 %v376, %v1166
      %1168 = vmatprep.mubr.bf16.mxu0 %v838
      %1169 = vmatmul.mubr.bf16.gmra.mrb[0].mxu0 %v627
      %v1170 = vpop.f32.mrb[0].mxu0
      %v1171 = vadd.f32 %v372, %v1170
      %v1172 = vpop.f32.mrb[0].mxu0
      %v1173 = vadd.f32 %v376, %v1172
      %v1174 = vpop.f32.mrb[0].mxu0
      %v1175 = vadd.f32 %v372, %v1174
      %v1176 = vpop.f32.mrb[0].mxu0
      %v1177 = vadd.f32 %v376, %v1176
      %1178 = vmatprep.mubr.bf16.mxu0 %v841
      %1179 = vmatmul.mubr.bf16.gmra.mrb[0].mxu0 %v629
      %v1180 = vpop.f32.mrb[0].mxu0
      %v1181 = vadd.f32 %v372, %v1180
      %v1182 = vpop.f32.mrb[0].mxu0
      %v1183 = vadd.f32 %v376, %v1182
      %v1184 = vpop.f32.mrb[0].mxu0
      %v1185 = vadd.f32 %v372, %v1184
      %v1186 = vpop.f32.mrb[0].mxu0
      %v1187 = vadd.f32 %v376, %v1186
      %1188 = vmatprep.mubr.bf16.mxu0 %v844
      %1189 = vmatmul.mubr.bf16.gmra.mrb[0].mxu0 %v631
      %v1190 = vpop.f32.mrb[0].mxu0
      %v1191 = vadd.f32 %v372, %v1190
      %v1192 = vpop.f32.mrb[0].mxu0
      %v1193 = vadd.f32 %v376, %v1192
      %v1194 = vpop.f32.mrb[0].mxu0
      %v1195 = vadd.f32 %v372, %v1194
      %v1196 = vpop.f32.mrb[0].mxu0
      %v1197 = vadd.f32 %v376, %v1196
      %1198 = vmatprep.mubr.bf16.mxu0 %v847
      %1199 = vmatmul.mubr.bf16.gmra.mrb[0].mxu0 %v633
      %v1200 = vpop.f32.mrb[0].mxu0
      %v1201 = vadd.f32 %v372, %v1200
      %v1202 = vpop.f32.mrb[0].mxu0
      %v1203 = vadd.f32 %v376, %v1202
      %v1204 = vpop.f32.mrb[0].mxu0
      %v1205 = vadd.f32 %v372, %v1204
      %v1206 = vpop.f32.mrb[0].mxu0
      %v1207 = vadd.f32 %v376, %v1206
      %1208 = vdwg.mxu0
      %v1209 = vmax.f32 %v891, 0.0
      %v1210 = vmax.f32 %v893, 0.0
      %v1211 = vmax.f32 %v895, 0.0
      %v1212 = vmax.f32 %v897, 0.0
      %v1213 = vmax.f32 %v901, 0.0
      %v1214 = vmax.f32 %v903, 0.0
      %v1215 = vmax.f32 %v905, 0.0
      %v1216 = vmax.f32 %v907, 0.0
      %v1217 = vmax.f32 %v911, 0.0
      %v1218 = vmax.f32 %v913, 0.0
      %v1219 = vmax.f32 %v915, 0.0
      %v1220 = vmax.f32 %v917, 0.0
      %v1221 = vmax.f32 %v921, 0.0
      %v1222 = vmax.f32 %v923, 0.0
      %v1223 = vmax.f32 %v925, 0.0
      %v1224 = vmax.f32 %v927, 0.0
      %v1225 = vmax.f32 %v931, 0.0
      %v1226 = vmax.f32 %v933, 0.0
      %v1227 = vmax.f32 %v935, 0.0
      %v1228 = vmax.f32 %v937, 0.0
      %v1229 = vmax.f32 %v941, 0.0
      %v1230 = vmax.f32 %v943, 0.0
      %v1231 = vmax.f32 %v945, 0.0
      %v1232 = vmax.f32 %v947, 0.0
      %v1233 = vmax.f32 %v951, 0.0
      %v1234 = vmax.f32 %v953, 0.0
      %v1235 = vmax.f32 %v955, 0.0
      %v1236 = vmax.f32 %v957, 0.0
      %v1237 = vmax.f32 %v961, 0.0
      %v1238 = vmax.f32 %v963, 0.0
      %v1239 = vmax.f32 %v965, 0.0
      %v1240 = vmax.f32 %v967, 0.0
      %v1241 = vmax.f32 %v971, 0.0
      %v1242 = vmax.f32 %v973, 0.0
      %v1243 = vmax.f32 %v975, 0.0
      %v1244 = vmax.f32 %v977, 0.0
      %v1245 = vmax.f32 %v981, 0.0
      %v1246 = vmax.f32 %v983, 0.0
      %v1247 = vmax.f32 %v985, 0.0
      %v1248 = vmax.f32 %v987, 0.0
      %v1249 = vmax.f32 %v991, 0.0
      %v1250 = vmax.f32 %v993, 0.0
      %v1251 = vmax.f32 %v995, 0.0
      %v1252 = vmax.f32 %v997, 0.0
      %v1253 = vmax.f32 %v1001, 0.0
      %v1254 = vmax.f32 %v1003, 0.0
      %v1255 = vmax.f32 %v1005, 0.0
      %v1256 = vmax.f32 %v1007, 0.0
      %v1257 = vmax.f32 %v1011, 0.0
      %v1258 = vmax.f32 %v1013, 0.0
      %v1259 = vmax.f32 %v1015, 0.0
      %v1260 = vmax.f32 %v1017, 0.0
      %v1261 = vmax.f32 %v1021, 0.0
      %v1262 = vmax.f32 %v1023, 0.0
      %v1263 = vmax.f32 %v1025, 0.0
      %v1264 = vmax.f32 %v1027, 0.0
      %v1265 = vmax.f32 %v1031, 0.0
      %v1266 = vmax.f32 %v1033, 0.0
      %v1267 = vmax.f32 %v1035, 0.0
      %v1268 = vmax.f32 %v1037, 0.0
      %v1269 = vmax.f32 %v1041, 0.0
      %v1270 = vmax.f32 %v1043, 0.0
      %v1271 = vmax.f32 %v1045, 0.0
      %v1272 = vmax.f32 %v1047, 0.0
      %v1273 = vmax.f32 %v1051, 0.0
      %v1274 = vmax.f32 %v1053, 0.0
      %v1275 = vmax.f32 %v1055, 0.0
      %v1276 = vmax.f32 %v1057, 0.0
      %v1277 = vmax.f32 %v1061, 0.0
      %v1278 = vmax.f32 %v1063, 0.0
      %v1279 = vmax.f32 %v1065, 0.0
      %v1280 = vmax.f32 %v1067, 0.0
      %v1281 = vmax.f32 %v1071, 0.0
      %v1282 = vmax.f32 %v1073, 0.0
      %v1283 = vmax.f32 %v1075, 0.0
      %v1284 = vmax.f32 %v1077, 0.0
      %v1285 = vmax.f32 %v1081, 0.0
      %v1286 = vmax.f32 %v1083, 0.0
      %v1287 = vmax.f32 %v1085, 0.0
      %v1288 = vmax.f32 %v1087, 0.0
      %v1289 = vmax.f32 %v1091, 0.0
      %v1290 = vmax.f32 %v1093, 0.0
      %v1291 = vmax.f32 %v1095, 0.0
      %v1292 = vmax.f32 %v1097, 0.0
      %v1293 = vmax.f32 %v1101, 0.0
      %v1294 = vmax.f32 %v1103, 0.0
      %v1295 = vmax.f32 %v1105, 0.0
      %v1296 = vmax.f32 %v1107, 0.0
      %v1297 = vmax.f32 %v1111, 0.0
      %v1298 = vmax.f32 %v1113, 0.0
      %v1299 = vmax.f32 %v1115, 0.0
      %v1300 = vmax.f32 %v1117, 0.0
      %v1301 = vmax.f32 %v1121, 0.0
      %v1302 = vmax.f32 %v1123, 0.0
      %v1303 = vmax.f32 %v1125, 0.0
      %v1304 = vmax.f32 %v1127, 0.0
      %v1305 = vmax.f32 %v1131, 0.0
      %v1306 = vmax.f32 %v1133, 0.0
      %v1307 = vmax.f32 %v1135, 0.0
      %v1308 = vmax.f32 %v1137, 0.0
      %v1309 = vmax.f32 %v1141, 0.0
      %v1310 = vmax.f32 %v1143, 0.0
      %v1311 = vmax.f32 %v1145, 0.0
      %v1312 = vmax.f32 %v1147, 0.0
      %v1313 = vmax.f32 %v1151, 0.0
      %v1314 = vmax.f32 %v1153, 0.0
      %v1315 = vmax.f32 %v1155, 0.0
      %v1316 = vmax.f32 %v1157, 0.0
      %v1317 = vmax.f32 %v1161, 0.0
      %v1318 = vmax.f32 %v1163, 0.0
      %v1319 = vmax.f32 %v1165, 0.0
      %v1320 = vmax.f32 %v1167, 0.0
      %v1321 = vmax.f32 %v1171, 0.0
      %v1322 = vmax.f32 %v1173, 0.0
      %v1323 = vmax.f32 %v1175, 0.0
      %v1324 = vmax.f32 %v1177, 0.0
      %v1325 = vmax.f32 %v1181, 0.0
      %v1326 = vmax.f32 %v1183, 0.0
      %v1327 = vmax.f32 %v1185, 0.0
      %v1328 = vmax.f32 %v1187, 0.0
      %v1329 = vmax.f32 %v1191, 0.0
      %v1330 = vmax.f32 %v1193, 0.0
      %v1331 = vmax.f32 %v1195, 0.0
      %v1332 = vmax.f32 %v1197, 0.0
      %v1333 = vmax.f32 %v1201, 0.0
      %v1334 = vmax.f32 %v1203, 0.0
      %v1335 = vmax.f32 %v1205, 0.0
      %v1336 = vmax.f32 %v1207, 0.0
      %v1337 = vpack.c.bf16 %v1211, %v1209
      %v1338 = vpack.c.bf16 %v1212, %v1210
      %v1339 = vpack.c.bf16 %v1215, %v1213
      %v1340 = vpack.c.bf16 %v1216, %v1214
      %v1341 = vpack.c.bf16 %v1219, %v1217
      %v1342 = vpack.c.bf16 %v1220, %v1218
      %v1343 = vpack.c.bf16 %v1223, %v1221
      %v1344 = vpack.c.bf16 %v1224, %v1222
      %v1345 = vpack.c.bf16 %v1227, %v1225
      %v1346 = vpack.c.bf16 %v1228, %v1226
      %v1347 = vpack.c.bf16 %v1231, %v1229
      %v1348 = vpack.c.bf16 %v1232, %v1230
      %v1349 = vpack.c.bf16 %v1235, %v1233
      %v1350 = vpack.c.bf16 %v1236, %v1234
      %v1351 = vpack.c.bf16 %v1239, %v1237
      %v1352 = vpack.c.bf16 %v1240, %v1238
      %v1353 = vpack.c.bf16 %v1243, %v1241
      %v1354 = vpack.c.bf16 %v1244, %v1242
      %v1355 = vpack.c.bf16 %v1247, %v1245
      %v1356 = vpack.c.bf16 %v1248, %v1246
      %v1357 = vpack.c.bf16 %v1251, %v1249
      %v1358 = vpack.c.bf16 %v1252, %v1250
      %v1359 = vpack.c.bf16 %v1255, %v1253
      %v1360 = vpack.c.bf16 %v1256, %v1254
      %v1361 = vpack.c.bf16 %v1259, %v1257
      %v1362 = vpack.c.bf16 %v1260, %v1258
      %v1363 = vpack.c.bf16 %v1263, %v1261
      %v1364 = vpack.c.bf16 %v1264, %v1262
      %v1365 = vpack.c.bf16 %v1267, %v1265
      %v1366 = vpack.c.bf16 %v1268, %v1266
      %v1367 = vpack.c.bf16 %v1271, %v1269
      %v1368 = vpack.c.bf16 %v1272, %v1270
      %v1369 = vpack.c.bf16 %v1275, %v1273
      %v1370 = vpack.c.bf16 %v1276, %v1274
      %v1371 = vpack.c.bf16 %v1279, %v1277
      %v1372 = vpack.c.bf16 %v1280, %v1278
      %v1373 = vpack.c.bf16 %v1283, %v1281
      %v1374 = vpack.c.bf16 %v1284, %v1282
      %v1375 = vpack.c.bf16 %v1287, %v1285
      %v1376 = vpack.c.bf16 %v1288, %v1286
      %v1377 = vpack.c.bf16 %v1291, %v1289
      %v1378 = vpack.c.bf16 %v1292, %v1290
      %v1379 = vpack.c.bf16 %v1295, %v1293
      %v1380 = vpack.c.bf16 %v1296, %v1294
      %v1381 = vpack.c.bf16 %v1299, %v1297
      %v1382 = vpack.c.bf16 %v1300, %v1298
      %v1383 = vpack.c.bf16 %v1303, %v1301
      %v1384 = vpack.c.bf16 %v1304, %v1302
      %v1385 = vpack.c.bf16 %v1307, %v1305
      %v1386 = vpack.c.bf16 %v1308, %v1306
      %v1387 = vpack.c.bf16 %v1311, %v1309
      %v1388 = vpack.c.bf16 %v1312, %v1310
      %v1389 = vpack.c.bf16 %v1315, %v1313
      %v1390 = vpack.c.bf16 %v1316, %v1314
      %v1391 = vpack.c.bf16 %v1319, %v1317
      %v1392 = vpack.c.bf16 %v1320, %v1318
      %v1393 = vpack.c.bf16 %v1323, %v1321
      %v1394 = vpack.c.bf16 %v1324, %v1322
      %v1395 = vpack.c.bf16 %v1327, %v1325
      %v1396 = vpack.c.bf16 %v1328, %v1326
      %v1397 = vpack.c.bf16 %v1331, %v1329
      %v1398 = vpack.c.bf16 %v1332, %v1330
      %v1399 = vpack.c.bf16 %v1335, %v1333
      %v1400 = vpack.c.bf16 %v1336, %v1334
      %v1401 = vld [vmem:[%s2] sm:$0xf]
      %v1402 = vld [vmem:[%s2 + $0x4] sm:$0xf]
      %v1403 = vld [vmem:[%s2 + $0x8] sm:$0xf]
      %v1404 = vld [vmem:[%s2 + $0xc] sm:$0xf]
      %v1405 = vld [vmem:[%s2 + $0x10] sm:$0xf]
      %v1406 = vld [vmem:[%s2 + $0x14] sm:$0xf]
      %v1407 = vld [vmem:[%s2 + $0x18] sm:$0xf]
      %v1408 = vld [vmem:[%s2 + $0x1c] sm:$0xf]
      %v1409 = vld [vmem:[%s2 + $0x20] sm:$0xf]
      %v1410 = vld [vmem:[%s2 + $0x24] sm:$0xf]
      %v1411 = vld [vmem:[%s2 + $0x28] sm:$0xf]
      %v1412 = vld [vmem:[%s2 + $0x2c] sm:$0xf]
      %v1413 = vld [vmem:[%s2 + $0x30] sm:$0xf]
      %v1414 = vld [vmem:[%s2 + $0x34] sm:$0xf]
      %v1415 = vld [vmem:[%s2 + $0x38] sm:$0xf]
      %v1416 = vld [vmem:[%s2 + $0x3c] sm:$0xf]
      %v1417 = vld [vmem:[%s2 + $0x40] sm:$0xf]
      %v1418 = vld [vmem:[%s2 + $0x44] sm:$0xf]
      %v1419 = vld [vmem:[%s2 + $0x48] sm:$0xf]
      %v1420 = vld [vmem:[%s2 + $0x4c] sm:$0xf]
      %v1421 = vld [vmem:[%s2 + $0x50] sm:$0xf]
      %v1422 = vld [vmem:[%s2 + $0x54] sm:$0xf]
      %v1423 = vld [vmem:[%s2 + $0x58] sm:$0xf]
      %v1424 = vld [vmem:[%s2 + $0x5c] sm:$0xf]
      %v1425 = vld [vmem:[%s2 + $0x60] sm:$0xf]
      %v1426 = vld [vmem:[%s2 + $0x64] sm:$0xf]
      %v1427 = vld [vmem:[%s2 + $0x68] sm:$0xf]
      %v1428 = vld [vmem:[%s2 + $0x6c] sm:$0xf]
      %v1429 = vld [vmem:[%s2 + $0x70] sm:$0xf]
      %v1430 = vld [vmem:[%s2 + $0x74] sm:$0xf]
      %v1431 = vld [vmem:[%s2 + $0x78] sm:$0xf]
      %v1432 = vld [vmem:[%s2 + $0x7c] sm:$0xf]
      %v1433 = vld [vmem:[%s5] sm:$0x1]
      %v1435 = vlaneseq
      %v1436 = vshrl.u32 %v1435, 7
      %v1437 = vsub.s32 0, %v1436
      %v1438 = vrot.slane %v1433, %v1437
      %v1472 = vunpack.c.l.b16 %v1401
      %v1473 = vunpack.c.l.b16 %v1402
      %v1474 = vunpack.c.l.b16 %v1403
      %v1475 = vunpack.c.l.b16 %v1404
      %v1476 = vunpack.c.l.b16 %v1405
      %v1477 = vunpack.c.l.b16 %v1406
      %v1478 = vunpack.c.l.b16 %v1407
      %v1479 = vunpack.c.l.b16 %v1408
      %v1480 = vunpack.c.l.b16 %v1409
      %v1481 = vunpack.c.l.b16 %v1410
      %v1482 = vunpack.c.l.b16 %v1411
      %v1483 = vunpack.c.l.b16 %v1412
      %v1484 = vunpack.c.l.b16 %v1413
      %v1485 = vunpack.c.l.b16 %v1414
      %v1486 = vunpack.c.l.b16 %v1415
      %v1487 = vunpack.c.l.b16 %v1416
      %v1488 = vunpack.c.l.b16 %v1417
      %v1489 = vunpack.c.l.b16 %v1418
      %v1490 = vunpack.c.l.b16 %v1419
      %v1491 = vunpack.c.l.b16 %v1420
      %v1492 = vunpack.c.l.b16 %v1421
      %v1493 = vunpack.c.l.b16 %v1422
      %v1494 = vunpack.c.l.b16 %v1423
      %v1495 = vunpack.c.l.b16 %v1424
      %v1496 = vunpack.c.l.b16 %v1425
      %v1497 = vunpack.c.l.b16 %v1426
      %v1498 = vunpack.c.l.b16 %v1427
      %v1499 = vunpack.c.l.b16 %v1428
      %v1500 = vunpack.c.l.b16 %v1429
      %v1501 = vunpack.c.l.b16 %v1430
      %v1502 = vunpack.c.l.b16 %v1431
      %v1503 = vunpack.c.l.b16 %v1432
      %v1504 = vpack.c.b16 %v1473, %v1472
      %v1505 = vpack.c.b16 %v1475, %v1474
      %v1506 = vpack.c.b16 %v1477, %v1476
      %v1507 = vpack.c.b16 %v1479, %v1478
      %v1508 = vpack.c.b16 %v1481, %v1480
      %v1509 = vpack.c.b16 %v1483, %v1482
      %v1510 = vpack.c.b16 %v1485, %v1484
      %v1511 = vpack.c.b16 %v1487, %v1486
      %v1512 = vpack.c.b16 %v1489, %v1488
      %v1513 = vpack.c.b16 %v1491, %v1490
      %v1514 = vpack.c.b16 %v1493, %v1492
      %v1515 = vpack.c.b16 %v1495, %v1494
      %v1516 = vpack.c.b16 %v1497, %v1496
      %v1517 = vpack.c.b16 %v1499, %v1498
      %v1518 = vpack.c.b16 %v1501, %v1500
      %v1519 = vpack.c.b16 %v1503, %v1502
      %1536 = vmatprep.subr.bf16.mxu0 0
      %1537 = vmatpush1.bf16.msra.mxu0 %v1504
      %1538 = vmatprep.subr.bf16.mxu0 0
      %1539 = vmatpush1.bf16.msra.mxu0 %v1505
      %1540 = vmatprep.subr.bf16.mxu0 0
      %1541 = vmatpush1.bf16.msra.mxu0 %v1506
      %1542 = vmatprep.subr.bf16.mxu0 0
      %1543 = vmatpush1.bf16.msra.mxu0 %v1507
      %1544 = vmatprep.subr.bf16.mxu0 0
      %1545 = vmatpush1.bf16.msra.mxu0 %v1508
      %1546 = vmatprep.subr.bf16.mxu0 0
      %1547 = vmatpush1.bf16.msra.mxu0 %v1509
      %1548 = vmatprep.subr.bf16.mxu0 0
      %1549 = vmatpush1.bf16.msra.mxu0 %v1510
      %1550 = vmatprep.subr.bf16.mxu0 0
      %1551 = vmatpush1.bf16.msra.mxu0 %v1511
      %1552 = vmatprep.subr.bf16.mxu0 0
      %1553 = vmatpush1.bf16.msra.mxu0 %v1512
      %1554 = vmatprep.subr.bf16.mxu0 0
      %1555 = vmatpush1.bf16.msra.mxu0 %v1513
      %1556 = vmatprep.subr.bf16.mxu0 0
      %1557 = vmatpush1.bf16.msra.mxu0 %v1514
      %1558 = vmatprep.subr.bf16.mxu0 0
      %1559 = vmatpush1.bf16.msra.mxu0 %v1515
      %1560 = vmatprep.subr.bf16.mxu0 0
      %1561 = vmatpush1.bf16.msra.mxu0 %v1516
      %1562 = vmatprep.subr.bf16.mxu0 0
      %1563 = vmatpush1.bf16.msra.mxu0 %v1517
      %1564 = vmatprep.subr.bf16.mxu0 0
      %1565 = vmatpush1.bf16.msra.mxu0 %v1518
      %1566 = vmatprep.subr.bf16.mxu0 0
      %1567 = vmatpush1.bf16.msra.mxu0 %v1519
      %1568 = vmatprep.mubr.bf16.mxu0 %v1338
      %1569 = vmatmul.mubr.bf16.gmra.mrb[0].mxu0 %v1337
      %v1570 = vpop.f32.mrb[0].mxu0
      %v1571 = vadd.f32 %v1438, %v1570
      %v1572 = vpop.f32.mrb[0].mxu0
      %v1573 = vpop.f32.mrb[0].mxu0
      %v1574 = vadd.f32 %v1438, %v1573
      %v1575 = vpop.f32.mrb[0].mxu0
      %1576 = vmatprep.mubr.bf16.mxu0 %v1340
      %1577 = vmatmul.mubr.bf16.gmra.mrb[0].mxu0 %v1339
      %v1578 = vpop.f32.mrb[0].mxu0
      %v1579 = vadd.f32 %v1438, %v1578
      %v1580 = vpop.f32.mrb[0].mxu0
      %v1581 = vpop.f32.mrb[0].mxu0
      %v1582 = vadd.f32 %v1438, %v1581
      %v1583 = vpop.f32.mrb[0].mxu0
      %1584 = vmatprep.mubr.bf16.mxu0 %v1342
      %1585 = vmatmul.mubr.bf16.gmra.mrb[0].mxu0 %v1341
      %v1586 = vpop.f32.mrb[0].mxu0
      %v1587 = vadd.f32 %v1438, %v1586
      %v1588 = vpop.f32.mrb[0].mxu0
      %v1589 = vpop.f32.mrb[0].mxu0
      %v1590 = vadd.f32 %v1438, %v1589
      %v1591 = vpop.f32.mrb[0].mxu0
      %1592 = vmatprep.mubr.bf16.mxu0 %v1344
      %1593 = vmatmul.mubr.bf16.gmra.mrb[0].mxu0 %v1343
      %v1594 = vpop.f32.mrb[0].mxu0
      %v1595 = vadd.f32 %v1438, %v1594
      %v1596 = vpop.f32.mrb[0].mxu0
      %v1597 = vpop.f32.mrb[0].mxu0
      %v1598 = vadd.f32 %v1438, %v1597
      %v1599 = vpop.f32.mrb[0].mxu0
      %1600 = vmatprep.mubr.bf16.mxu0 %v1346
      %1601 = vmatmul.mubr.bf16.gmra.mrb[0].mxu0 %v1345
      %v1602 = vpop.f32.mrb[0].mxu0
      %v1603 = vadd.f32 %v1438, %v1602
      %v1604 = vpop.f32.mrb[0].mxu0
      %v1605 = vpop.f32.mrb[0].mxu0
      %v1606 = vadd.f32 %v1438, %v1605
      %v1607 = vpop.f32.mrb[0].mxu0
      %1608 = vmatprep.mubr.bf16.mxu0 %v1348
      %1609 = vmatmul.mubr.bf16.gmra.mrb[0].mxu0 %v1347
      %v1610 = vpop.f32.mrb[0].mxu0
      %v1611 = vadd.f32 %v1438, %v1610
      %v1612 = vpop.f32.mrb[0].mxu0
      %v1613 = vpop.f32.mrb[0].mxu0
      %v1614 = vadd.f32 %v1438, %v1613
      %v1615 = vpop.f32.mrb[0].mxu0
      %1616 = vmatprep.mubr.bf16.mxu0 %v1350
      %1617 = vmatmul.mubr.bf16.gmra.mrb[0].mxu0 %v1349
      %v1618 = vpop.f32.mrb[0].mxu0
      %v1619 = vadd.f32 %v1438, %v1618
      %v1620 = vpop.f32.mrb[0].mxu0
      %v1621 = vpop.f32.mrb[0].mxu0
      %v1622 = vadd.f32 %v1438, %v1621
      %v1623 = vpop.f32.mrb[0].mxu0
      %1624 = vmatprep.mubr.bf16.mxu0 %v1352
      %1625 = vmatmul.mubr.bf16.gmra.mrb[0].mxu0 %v1351
      %v1626 = vpop.f32.mrb[0].mxu0
      %v1627 = vadd.f32 %v1438, %v1626
      %v1628 = vpop.f32.mrb[0].mxu0
      %v1629 = vpop.f32.mrb[0].mxu0
      %v1630 = vadd.f32 %v1438, %v1629
      %v1631 = vpop.f32.mrb[0].mxu0
      %1632 = vmatprep.mubr.bf16.mxu0 %v1354
      %1633 = vmatmul.mubr.bf16.gmra.mrb[0].mxu0 %v1353
      %v1634 = vpop.f32.mrb[0].mxu0
      %v1635 = vadd.f32 %v1438, %v1634
      %v1636 = vpop.f32.mrb[0].mxu0
      %v1637 = vpop.f32.mrb[0].mxu0
      %v1638 = vadd.f32 %v1438, %v1637
      %v1639 = vpop.f32.mrb[0].mxu0
      %1640 = vmatprep.mubr.bf16.mxu0 %v1356
      %1641 = vmatmul.mubr.bf16.gmra.mrb[0].mxu0 %v1355
      %v1642 = vpop.f32.mrb[0].mxu0
      %v1643 = vadd.f32 %v1438, %v1642
      %v1644 = vpop.f32.mrb[0].mxu0
      %v1645 = vpop.f32.mrb[0].mxu0
      %v1646 = vadd.f32 %v1438, %v1645
      %v1647 = vpop.f32.mrb[0].mxu0
      %1648 = vmatprep.mubr.bf16.mxu0 %v1358
      %1649 = vmatmul.mubr.bf16.gmra.mrb[0].mxu0 %v1357
      %v1650 = vpop.f32.mrb[0].mxu0
      %v1651 = vadd.f32 %v1438, %v1650
      %v1652 = vpop.f32.mrb[0].mxu0
      %v1653 = vpop.f32.mrb[0].mxu0
      %v1654 = vadd.f32 %v1438, %v1653
      %v1655 = vpop.f32.mrb[0].mxu0
      %1656 = vmatprep.mubr.bf16.mxu0 %v1360
      %1657 = vmatmul.mubr.bf16.gmra.mrb[0].mxu0 %v1359
      %v1658 = vpop.f32.mrb[0].mxu0
      %v1659 = vadd.f32 %v1438, %v1658
      %v1660 = vpop.f32.mrb[0].mxu0
      %v1661 = vpop.f32.mrb[0].mxu0
      %v1662 = vadd.f32 %v1438, %v1661
      %v1663 = vpop.f32.mrb[0].mxu0
      %1664 = vmatprep.mubr.bf16.mxu0 %v1362
      %1665 = vmatmul.mubr.bf16.gmra.mrb[0].mxu0 %v1361
      %v1666 = vpop.f32.mrb[0].mxu0
      %v1667 = vadd.f32 %v1438, %v1666
      %v1668 = vpop.f32.mrb[0].mxu0
      %v1669 = vpop.f32.mrb[0].mxu0
      %v1670 = vadd.f32 %v1438, %v1669
      %v1671 = vpop.f32.mrb[0].mxu0
      %1672 = vmatprep.mubr.bf16.mxu0 %v1364
      %1673 = vmatmul.mubr.bf16.gmra.mrb[0].mxu0 %v1363
      %v1674 = vpop.f32.mrb[0].mxu0
      %v1675 = vadd.f32 %v1438, %v1674
      %v1676 = vpop.f32.mrb[0].mxu0
      %v1677 = vpop.f32.mrb[0].mxu0
      %v1678 = vadd.f32 %v1438, %v1677
      %v1679 = vpop.f32.mrb[0].mxu0
      %1680 = vmatprep.mubr.bf16.mxu0 %v1366
      %1681 = vmatmul.mubr.bf16.gmra.mrb[0].mxu0 %v1365
      %v1682 = vpop.f32.mrb[0].mxu0
      %v1683 = vadd.f32 %v1438, %v1682
      %v1684 = vpop.f32.mrb[0].mxu0
      %v1685 = vpop.f32.mrb[0].mxu0
      %v1686 = vadd.f32 %v1438, %v1685
      %v1687 = vpop.f32.mrb[0].mxu0
      %1688 = vmatprep.mubr.bf16.mxu0 %v1368
      %1689 = vmatmul.mubr.bf16.gmra.mrb[0].mxu0 %v1367
      %v1690 = vpop.f32.mrb[0].mxu0
      %v1691 = vadd.f32 %v1438, %v1690
      %v1692 = vpop.f32.mrb[0].mxu0
      %v1693 = vpop.f32.mrb[0].mxu0
      %v1694 = vadd.f32 %v1438, %v1693
      %v1695 = vpop.f32.mrb[0].mxu0
      %1696 = vmatprep.mubr.bf16.mxu0 %v1370
      %1697 = vmatmul.mubr.bf16.gmra.mrb[0].mxu0 %v1369
      %v1698 = vpop.f32.mrb[0].mxu0
      %v1699 = vadd.f32 %v1438, %v1698
      %v1700 = vpop.f32.mrb[0].mxu0
      %v1701 = vpop.f32.mrb[0].mxu0
      %v1702 = vadd.f32 %v1438, %v1701
      %v1703 = vpop.f32.mrb[0].mxu0
      %1704 = vmatprep.mubr.bf16.mxu0 %v1372
      %1705 = vmatmul.mubr.bf16.gmra.mrb[0].mxu0 %v1371
      %v1706 = vpop.f32.mrb[0].mxu0
      %v1707 = vadd.f32 %v1438, %v1706
      %v1708 = vpop.f32.mrb[0].mxu0
      %v1709 = vpop.f32.mrb[0].mxu0
      %v1710 = vadd.f32 %v1438, %v1709
      %v1711 = vpop.f32.mrb[0].mxu0
      %1712 = vmatprep.mubr.bf16.mxu0 %v1374
      %1713 = vmatmul.mubr.bf16.gmra.mrb[0].mxu0 %v1373
      %v1714 = vpop.f32.mrb[0].mxu0
      %v1715 = vadd.f32 %v1438, %v1714
      %v1716 = vpop.f32.mrb[0].mxu0
      %v1717 = vpop.f32.mrb[0].mxu0
      %v1718 = vadd.f32 %v1438, %v1717
      %v1719 = vpop.f32.mrb[0].mxu0
      %1720 = vmatprep.mubr.bf16.mxu0 %v1376
      %1721 = vmatmul.mubr.bf16.gmra.mrb[0].mxu0 %v1375
      %v1722 = vpop.f32.mrb[0].mxu0
      %v1723 = vadd.f32 %v1438, %v1722
      %v1724 = vpop.f32.mrb[0].mxu0
      %v1725 = vpop.f32.mrb[0].mxu0
      %v1726 = vadd.f32 %v1438, %v1725
      %v1727 = vpop.f32.mrb[0].mxu0
      %1728 = vmatprep.mubr.bf16.mxu0 %v1378
      %1729 = vmatmul.mubr.bf16.gmra.mrb[0].mxu0 %v1377
      %v1730 = vpop.f32.mrb[0].mxu0
      %v1731 = vadd.f32 %v1438, %v1730
      %v1732 = vpop.f32.mrb[0].mxu0
      %v1733 = vpop.f32.mrb[0].mxu0
      %v1734 = vadd.f32 %v1438, %v1733
      %v1735 = vpop.f32.mrb[0].mxu0
      %1736 = vmatprep.mubr.bf16.mxu0 %v1380
      %1737 = vmatmul.mubr.bf16.gmra.mrb[0].mxu0 %v1379
      %v1738 = vpop.f32.mrb[0].mxu0
      %v1739 = vadd.f32 %v1438, %v1738
      %v1740 = vpop.f32.mrb[0].mxu0
      %v1741 = vpop.f32.mrb[0].mxu0
      %v1742 = vadd.f32 %v1438, %v1741
      %v1743 = vpop.f32.mrb[0].mxu0
      %1744 = vmatprep.mubr.bf16.mxu0 %v1382
      %1745 = vmatmul.mubr.bf16.gmra.mrb[0].mxu0 %v1381
      %v1746 = vpop.f32.mrb[0].mxu0
      %v1747 = vadd.f32 %v1438, %v1746
      %v1748 = vpop.f32.mrb[0].mxu0
      %v1749 = vpop.f32.mrb[0].mxu0
      %v1750 = vadd.f32 %v1438, %v1749
      %v1751 = vpop.f32.mrb[0].mxu0
      %1752 = vmatprep.mubr.bf16.mxu0 %v1384
      %1753 = vmatmul.mubr.bf16.gmra.mrb[0].mxu0 %v1383
      %v1754 = vpop.f32.mrb[0].mxu0
      %v1755 = vadd.f32 %v1438, %v1754
      %v1756 = vpop.f32.mrb[0].mxu0
      %v1757 = vpop.f32.mrb[0].mxu0
      %v1758 = vadd.f32 %v1438, %v1757
      %v1759 = vpop.f32.mrb[0].mxu0
      %1760 = vmatprep.mubr.bf16.mxu0 %v1386
      %1761 = vmatmul.mubr.bf16.gmra.mrb[0].mxu0 %v1385
      %v1762 = vpop.f32.mrb[0].mxu0
      %v1763 = vadd.f32 %v1438, %v1762
      %v1764 = vpop.f32.mrb[0].mxu0
      %v1765 = vpop.f32.mrb[0].mxu0
      %v1766 = vadd.f32 %v1438, %v1765
      %v1767 = vpop.f32.mrb[0].mxu0
      %1768 = vmatprep.mubr.bf16.mxu0 %v1388
      %1769 = vmatmul.mubr.bf16.gmra.mrb[0].mxu0 %v1387
      %v1770 = vpop.f32.mrb[0].mxu0
      %v1771 = vadd.f32 %v1438, %v1770
      %v1772 = vpop.f32.mrb[0].mxu0
      %v1773 = vpop.f32.mrb[0].mxu0
      %v1774 = vadd.f32 %v1438, %v1773
      %v1775 = vpop.f32.mrb[0].mxu0
      %1776 = vmatprep.mubr.bf16.mxu0 %v1390
      %1777 = vmatmul.mubr.bf16.gmra.mrb[0].mxu0 %v1389
      %v1778 = vpop.f32.mrb[0].mxu0
      %v1779 = vadd.f32 %v1438, %v1778
      %v1780 = vpop.f32.mrb[0].mxu0
      %v1781 = vpop.f32.mrb[0].mxu0
      %v1782 = vadd.f32 %v1438, %v1781
      %v1783 = vpop.f32.mrb[0].mxu0
      %1784 = vmatprep.mubr.bf16.mxu0 %v1392
      %1785 = vmatmul.mubr.bf16.gmra.mrb[0].mxu0 %v1391
      %v1786 = vpop.f32.mrb[0].mxu0
      %v1787 = vadd.f32 %v1438, %v1786
      %v1788 = vpop.f32.mrb[0].mxu0
      %v1789 = vpop.f32.mrb[0].mxu0
      %v1790 = vadd.f32 %v1438, %v1789
      %v1791 = vpop.f32.mrb[0].mxu0
      %1792 = vmatprep.mubr.bf16.mxu0 %v1394
      %1793 = vmatmul.mubr.bf16.gmra.mrb[0].mxu0 %v1393
      %v1794 = vpop.f32.mrb[0].mxu0
      %v1795 = vadd.f32 %v1438, %v1794
      %v1796 = vpop.f32.mrb[0].mxu0
      %v1797 = vpop.f32.mrb[0].mxu0
      %v1798 = vadd.f32 %v1438, %v1797
      %v1799 = vpop.f32.mrb[0].mxu0
      %1800 = vmatprep.mubr.bf16.mxu0 %v1396
      %1801 = vmatmul.mubr.bf16.gmra.mrb[0].mxu0 %v1395
      %v1802 = vpop.f32.mrb[0].mxu0
      %v1803 = vadd.f32 %v1438, %v1802
      %v1804 = vpop.f32.mrb[0].mxu0
      %v1805 = vpop.f32.mrb[0].mxu0
      %v1806 = vadd.f32 %v1438, %v1805
      %v1807 = vpop.f32.mrb[0].mxu0
      %1808 = vmatprep.mubr.bf16.mxu0 %v1398
      %1809 = vmatmul.mubr.bf16.gmra.mrb[0].mxu0 %v1397
      %v1810 = vpop.f32.mrb[0].mxu0
      %v1811 = vadd.f32 %v1438, %v1810
      %v1812 = vpop.f32.mrb[0].mxu0
      %v1813 = vpop.f32.mrb[0].mxu0
      %v1814 = vadd.f32 %v1438, %v1813
      %v1815 = vpop.f32.mrb[0].mxu0
      %1816 = vmatprep.mubr.bf16.mxu0 %v1400
      %1817 = vmatmul.mubr.bf16.gmra.mrb[0].mxu0 %v1399
      %v1818 = vpop.f32.mrb[0].mxu0
      %v1819 = vadd.f32 %v1438, %v1818
      %v1820 = vpop.f32.mrb[0].mxu0
      %v1821 = vpop.f32.mrb[0].mxu0
      %v1822 = vadd.f32 %v1438, %v1821
      %v1823 = vpop.f32.mrb[0].mxu0
      %1824 = vdwg.mxu0
      %v1825 = vmax.f32 %v1571, 0.0
      %v1826 = vmax.f32 %v1574, 0.0
      %v1827 = vmax.f32 %v1579, 0.0
      %v1828 = vmax.f32 %v1582, 0.0
      %v1829 = vmax.f32 %v1587, 0.0
      %v1830 = vmax.f32 %v1590, 0.0
      %v1831 = vmax.f32 %v1595, 0.0
      %v1832 = vmax.f32 %v1598, 0.0
      %v1833 = vmax.f32 %v1603, 0.0
      %v1834 = vmax.f32 %v1606, 0.0
      %v1835 = vmax.f32 %v1611, 0.0
      %v1836 = vmax.f32 %v1614, 0.0
      %v1837 = vmax.f32 %v1619, 0.0
      %v1838 = vmax.f32 %v1622, 0.0
      %v1839 = vmax.f32 %v1627, 0.0
      %v1840 = vmax.f32 %v1630, 0.0
      %v1841 = vmax.f32 %v1635, 0.0
      %v1842 = vmax.f32 %v1638, 0.0
      %v1843 = vmax.f32 %v1643, 0.0
      %v1844 = vmax.f32 %v1646, 0.0
      %v1845 = vmax.f32 %v1651, 0.0
      %v1846 = vmax.f32 %v1654, 0.0
      %v1847 = vmax.f32 %v1659, 0.0
      %v1848 = vmax.f32 %v1662, 0.0
      %v1849 = vmax.f32 %v1667, 0.0
      %v1850 = vmax.f32 %v1670, 0.0
      %v1851 = vmax.f32 %v1675, 0.0
      %v1852 = vmax.f32 %v1678, 0.0
      %v1853 = vmax.f32 %v1683, 0.0
      %v1854 = vmax.f32 %v1686, 0.0
      %v1855 = vmax.f32 %v1691, 0.0
      %v1856 = vmax.f32 %v1694, 0.0
      %v1857 = vmax.f32 %v1699, 0.0
      %v1858 = vmax.f32 %v1702, 0.0
      %v1859 = vmax.f32 %v1707, 0.0
      %v1860 = vmax.f32 %v1710, 0.0
      %v1861 = vmax.f32 %v1715, 0.0
      %v1862 = vmax.f32 %v1718, 0.0
      %v1863 = vmax.f32 %v1723, 0.0
      %v1864 = vmax.f32 %v1726, 0.0
      %v1865 = vmax.f32 %v1731, 0.0
      %v1866 = vmax.f32 %v1734, 0.0
      %v1867 = vmax.f32 %v1739, 0.0
      %v1868 = vmax.f32 %v1742, 0.0
      %v1869 = vmax.f32 %v1747, 0.0
      %v1870 = vmax.f32 %v1750, 0.0
      %v1871 = vmax.f32 %v1755, 0.0
      %v1872 = vmax.f32 %v1758, 0.0
      %v1873 = vmax.f32 %v1763, 0.0
      %v1874 = vmax.f32 %v1766, 0.0
      %v1875 = vmax.f32 %v1771, 0.0
      %v1876 = vmax.f32 %v1774, 0.0
      %v1877 = vmax.f32 %v1779, 0.0
      %v1878 = vmax.f32 %v1782, 0.0
      %v1879 = vmax.f32 %v1787, 0.0
      %v1880 = vmax.f32 %v1790, 0.0
      %v1881 = vmax.f32 %v1795, 0.0
      %v1882 = vmax.f32 %v1798, 0.0
      %v1883 = vmax.f32 %v1803, 0.0
      %v1884 = vmax.f32 %v1806, 0.0
      %v1885 = vmax.f32 %v1811, 0.0
      %v1886 = vmax.f32 %v1814, 0.0
      %v1887 = vmax.f32 %v1819, 0.0
      %v1888 = vmax.f32 %v1822, 0.0
      %v1889 = vpack.c.bf16 %v1826, %v1825
      %v1890 = vpack.c.bf16 %v1828, %v1827
      %v1891 = vpack.c.bf16 %v1830, %v1829
      %v1892 = vpack.c.bf16 %v1832, %v1831
      %v1893 = vpack.c.bf16 %v1834, %v1833
      %v1894 = vpack.c.bf16 %v1836, %v1835
      %v1895 = vpack.c.bf16 %v1838, %v1837
      %v1896 = vpack.c.bf16 %v1840, %v1839
      %v1897 = vpack.c.bf16 %v1842, %v1841
      %v1898 = vpack.c.bf16 %v1844, %v1843
      %v1899 = vpack.c.bf16 %v1846, %v1845
      %v1900 = vpack.c.bf16 %v1848, %v1847
      %v1901 = vpack.c.bf16 %v1850, %v1849
      %v1902 = vpack.c.bf16 %v1852, %v1851
      %v1903 = vpack.c.bf16 %v1854, %v1853
      %v1904 = vpack.c.bf16 %v1856, %v1855
      %v1905 = vpack.c.bf16 %v1858, %v1857
      %v1906 = vpack.c.bf16 %v1860, %v1859
      %v1907 = vpack.c.bf16 %v1862, %v1861
      %v1908 = vpack.c.bf16 %v1864, %v1863
      %v1909 = vpack.c.bf16 %v1866, %v1865
      %v1910 = vpack.c.bf16 %v1868, %v1867
      %v1911 = vpack.c.bf16 %v1870, %v1869
      %v1912 = vpack.c.bf16 %v1872, %v1871
      %v1913 = vpack.c.bf16 %v1874, %v1873
      %v1914 = vpack.c.bf16 %v1876, %v1875
      %v1915 = vpack.c.bf16 %v1878, %v1877
      %v1916 = vpack.c.bf16 %v1880, %v1879
      %v1917 = vpack.c.bf16 %v1882, %v1881
      %v1918 = vpack.c.bf16 %v1884, %v1883
      %v1919 = vpack.c.bf16 %v1886, %v1885
      %v1920 = vpack.c.bf16 %v1888, %v1887
      %v1921 = vld [vmem:[%s3] sm:$0xf]
      %v1922 = vld [vmem:[%s3 + $0x4] sm:$0xf]
      %v1923 = vld [vmem:[%s3 + $0x8] sm:$0xf]
      %v1924 = vld [vmem:[%s3 + $0xc] sm:$0xf]
      %v1925 = vld [vmem:[%s3 + $0x10] sm:$0xf]
      %v1926 = vld [vmem:[%s3 + $0x14] sm:$0xf]
      %v1927 = vld [vmem:[%s3 + $0x18] sm:$0xf]
      %v1928 = vld [vmem:[%s3 + $0x1c] sm:$0xf]
      %v1929 = vld [vmem:[%s3 + $0x20] sm:$0xf]
      %v1930 = vld [vmem:[%s3 + $0x24] sm:$0xf]
      %v1931 = vld [vmem:[%s3 + $0x28] sm:$0xf]
      %v1932 = vld [vmem:[%s3 + $0x2c] sm:$0xf]
      %v1933 = vld [vmem:[%s3 + $0x30] sm:$0xf]
      %v1934 = vld [vmem:[%s3 + $0x34] sm:$0xf]
      %v1935 = vld [vmem:[%s3 + $0x38] sm:$0xf]
      %v1936 = vld [vmem:[%s3 + $0x3c] sm:$0xf]
      %v1937 = vld [vmem:[%s6] sm:$0x1]
      %v1939 = vlaneseq
      %v1940 = vshrl.u32 %v1939, 7
      %v1941 = vsub.s32 0, %v1940
      %v1942 = vrot.slane %v1937, %v1941
      %v1960 = vunpack.c.l.b16 %v1921
      %v1961 = vunpack.c.l.b16 %v1922
      %v1962 = vunpack.c.l.b16 %v1923
      %v1963 = vunpack.c.l.b16 %v1924
      %v1964 = vunpack.c.l.b16 %v1925
      %v1965 = vunpack.c.l.b16 %v1926
      %v1966 = vunpack.c.l.b16 %v1927
      %v1967 = vunpack.c.l.b16 %v1928
      %v1968 = vunpack.c.l.b16 %v1929
      %v1969 = vunpack.c.l.b16 %v1930
      %v1970 = vunpack.c.l.b16 %v1931
      %v1971 = vunpack.c.l.b16 %v1932
      %v1972 = vunpack.c.l.b16 %v1933
      %v1973 = vunpack.c.l.b16 %v1934
      %v1974 = vunpack.c.l.b16 %v1935
      %v1975 = vunpack.c.l.b16 %v1936
      %v1976 = vpack.c.b16 %v1961, %v1960
      %v1977 = vpack.c.b16 %v1963, %v1962
      %v1978 = vpack.c.b16 %v1965, %v1964
      %v1979 = vpack.c.b16 %v1967, %v1966
      %v1980 = vpack.c.b16 %v1969, %v1968
      %v1981 = vpack.c.b16 %v1971, %v1970
      %v1982 = vpack.c.b16 %v1973, %v1972
      %v1983 = vpack.c.b16 %v1975, %v1974
      %1992 = vmatprep.subr.bf16.mxu0 0
      %1993 = vmatpush1.bf16.msra.mxu0 %v1976
      %1994 = vmatprep.subr.bf16.mxu0 0
      %1995 = vmatpush1.bf16.msra.mxu0 %v1977
      %1996 = vmatprep.subr.bf16.mxu0 0
      %1997 = vmatpush1.bf16.msra.mxu0 %v1978
      %1998 = vmatprep.subr.bf16.mxu0 0
      %1999 = vmatpush1.bf16.msra.mxu0 %v1979
      %2000 = vmatprep.subr.bf16.mxu0 0
      %2001 = vmatpush1.bf16.msra.mxu0 %v1980
      %2002 = vmatprep.subr.bf16.mxu0 0
      %2003 = vmatpush1.bf16.msra.mxu0 %v1981
      %2004 = vmatprep.subr.bf16.mxu0 0
      %2005 = vmatpush1.bf16.msra.mxu0 %v1982
      %2006 = vmatprep.subr.bf16.mxu0 0
      %2007 = vmatpush1.bf16.msra.mxu0 %v1983
      %2008 = vmatprep.subr.bf16.mxu0 0
      %2009 = vmatpush1.bf16.msra.mxu0 0
      %2010 = vmatprep.subr.bf16.mxu0 0
      %2011 = vmatpush1.bf16.msra.mxu0 0
      %2012 = vmatprep.subr.bf16.mxu0 0
      %2013 = vmatpush1.bf16.msra.mxu0 0
      %2014 = vmatprep.subr.bf16.mxu0 0
      %2015 = vmatpush1.bf16.msra.mxu0 0
      %2016 = vmatprep.subr.bf16.mxu0 0
      %2017 = vmatpush1.bf16.msra.mxu0 0
      %2018 = vmatprep.subr.bf16.mxu0 0
      %2019 = vmatpush1.bf16.msra.mxu0 0
      %2020 = vmatprep.subr.bf16.mxu0 0
      %2021 = vmatpush1.bf16.msra.mxu0 0
      %2022 = vmatprep.subr.bf16.mxu0 0
      %2023 = vmatpush1.bf16.msra.mxu0 0
      %2024 = vmatprep.mubr.bf16.mxu0 0
      %2025 = vmatmul.mubr.bf16.gmra.mrb[0].mxu0 %v1889
      %v2026 = vpop.f32.mrb[0].mxu0
      %v2027 = vadd.f32 %v1942, %v2026
      %v2028 = vpop.f32.mrb[0].mxu0
      %v2029 = vpop.f32.mrb[0].mxu0
      %v2030 = vadd.f32 %v1942, %v2029
      %v2031 = vpop.f32.mrb[0].mxu0
      %2032 = vmatprep.mubr.bf16.mxu0 0
      %2033 = vmatmul.mubr.bf16.gmra.mrb[0].mxu0 %v1890
      %v2034 = vpop.f32.mrb[0].mxu0
      %v2035 = vadd.f32 %v1942, %v2034
      %v2036 = vpop.f32.mrb[0].mxu0
      %v2037 = vpop.f32.mrb[0].mxu0
      %v2038 = vadd.f32 %v1942, %v2037
      %v2039 = vpop.f32.mrb[0].mxu0
      %2040 = vmatprep.mubr.bf16.mxu0 0
      %2041 = vmatmul.mubr.bf16.gmra.mrb[0].mxu0 %v1891
      %v2042 = vpop.f32.mrb[0].mxu0
      %v2043 = vadd.f32 %v1942, %v2042
      %v2044 = vpop.f32.mrb[0].mxu0
      %v2045 = vpop.f32.mrb[0].mxu0
      %v2046 = vadd.f32 %v1942, %v2045
      %v2047 = vpop.f32.mrb[0].mxu0
      %2048 = vmatprep.mubr.bf16.mxu0 0
      %2049 = vmatmul.mubr.bf16.gmra.mrb[0].mxu0 %v1892
      %v2050 = vpop.f32.mrb[0].mxu0
      %v2051 = vadd.f32 %v1942, %v2050
      %v2052 = vpop.f32.mrb[0].mxu0
      %v2053 = vpop.f32.mrb[0].mxu0
      %v2054 = vadd.f32 %v1942, %v2053
      %v2055 = vpop.f32.mrb[0].mxu0
      %2056 = vmatprep.mubr.bf16.mxu0 0
      %2057 = vmatmul.mubr.bf16.gmra.mrb[0].mxu0 %v1893
      %v2058 = vpop.f32.mrb[0].mxu0
      %v2059 = vadd.f32 %v1942, %v2058
      %v2060 = vpop.f32.mrb[0].mxu0
      %v2061 = vpop.f32.mrb[0].mxu0
      %v2062 = vadd.f32 %v1942, %v2061
      %v2063 = vpop.f32.mrb[0].mxu0
      %2064 = vmatprep.mubr.bf16.mxu0 0
      %2065 = vmatmul.mubr.bf16.gmra.mrb[0].mxu0 %v1894
      %v2066 = vpop.f32.mrb[0].mxu0
      %v2067 = vadd.f32 %v1942, %v2066
      %v2068 = vpop.f32.mrb[0].mxu0
      %v2069 = vpop.f32.mrb[0].mxu0
      %v2070 = vadd.f32 %v1942, %v2069
      %v2071 = vpop.f32.mrb[0].mxu0
      %2072 = vmatprep.mubr.bf16.mxu0 0
      %2073 = vmatmul.mubr.bf16.gmra.mrb[0].mxu0 %v1895
      %v2074 = vpop.f32.mrb[0].mxu0
      %v2075 = vadd.f32 %v1942, %v2074
      %v2076 = vpop.f32.mrb[0].mxu0
      %v2077 = vpop.f32.mrb[0].mxu0
      %v2078 = vadd.f32 %v1942, %v2077
      %v2079 = vpop.f32.mrb[0].mxu0
      %2080 = vmatprep.mubr.bf16.mxu0 0
      %2081 = vmatmul.mubr.bf16.gmra.mrb[0].mxu0 %v1896
      %v2082 = vpop.f32.mrb[0].mxu0
      %v2083 = vadd.f32 %v1942, %v2082
      %v2084 = vpop.f32.mrb[0].mxu0
      %v2085 = vpop.f32.mrb[0].mxu0
      %v2086 = vadd.f32 %v1942, %v2085
      %v2087 = vpop.f32.mrb[0].mxu0
      %2088 = vmatprep.mubr.bf16.mxu0 0
      %2089 = vmatmul.mubr.bf16.gmra.mrb[0].mxu0 %v1897
      %v2090 = vpop.f32.mrb[0].mxu0
      %v2091 = vadd.f32 %v1942, %v2090
      %v2092 = vpop.f32.mrb[0].mxu0
      %v2093 = vpop.f32.mrb[0].mxu0
      %v2094 = vadd.f32 %v1942, %v2093
      %v2095 = vpop.f32.mrb[0].mxu0
      %2096 = vmatprep.mubr.bf16.mxu0 0
      %2097 = vmatmul.mubr.bf16.gmra.mrb[0].mxu0 %v1898
      %v2098 = vpop.f32.mrb[0].mxu0
      %v2099 = vadd.f32 %v1942, %v2098
      %v2100 = vpop.f32.mrb[0].mxu0
      %v2101 = vpop.f32.mrb[0].mxu0
      %v2102 = vadd.f32 %v1942, %v2101
      %v2103 = vpop.f32.mrb[0].mxu0
      %2104 = vmatprep.mubr.bf16.mxu0 0
      %2105 = vmatmul.mubr.bf16.gmra.mrb[0].mxu0 %v1899
      %v2106 = vpop.f32.mrb[0].mxu0
      %v2107 = vadd.f32 %v1942, %v2106
      %v2108 = vpop.f32.mrb[0].mxu0
      %v2109 = vpop.f32.mrb[0].mxu0
      %v2110 = vadd.f32 %v1942, %v2109
      %v2111 = vpop.f32.mrb[0].mxu0
      %2112 = vmatprep.mubr.bf16.mxu0 0
      %2113 = vmatmul.mubr.bf16.gmra.mrb[0].mxu0 %v1900
      %v2114 = vpop.f32.mrb[0].mxu0
      %v2115 = vadd.f32 %v1942, %v2114
      %v2116 = vpop.f32.mrb[0].mxu0
      %v2117 = vpop.f32.mrb[0].mxu0
      %v2118 = vadd.f32 %v1942, %v2117
      %v2119 = vpop.f32.mrb[0].mxu0
      %2120 = vmatprep.mubr.bf16.mxu0 0
      %2121 = vmatmul.mubr.bf16.gmra.mrb[0].mxu0 %v1901
      %v2122 = vpop.f32.mrb[0].mxu0
      %v2123 = vadd.f32 %v1942, %v2122
      %v2124 = vpop.f32.mrb[0].mxu0
      %v2125 = vpop.f32.mrb[0].mxu0
      %v2126 = vadd.f32 %v1942, %v2125
      %v2127 = vpop.f32.mrb[0].mxu0
      %2128 = vmatprep.mubr.bf16.mxu0 0
      %2129 = vmatmul.mubr.bf16.gmra.mrb[0].mxu0 %v1902
      %v2130 = vpop.f32.mrb[0].mxu0
      %v2131 = vadd.f32 %v1942, %v2130
      %v2132 = vpop.f32.mrb[0].mxu0
      %v2133 = vpop.f32.mrb[0].mxu0
      %v2134 = vadd.f32 %v1942, %v2133
      %v2135 = vpop.f32.mrb[0].mxu0
      %2136 = vmatprep.mubr.bf16.mxu0 0
      %2137 = vmatmul.mubr.bf16.gmra.mrb[0].mxu0 %v1903
      %v2138 = vpop.f32.mrb[0].mxu0
      %v2139 = vadd.f32 %v1942, %v2138
      %v2140 = vpop.f32.mrb[0].mxu0
      %v2141 = vpop.f32.mrb[0].mxu0
      %v2142 = vadd.f32 %v1942, %v2141
      %v2143 = vpop.f32.mrb[0].mxu0
      %2144 = vmatprep.mubr.bf16.mxu0 0
      %2145 = vmatmul.mubr.bf16.gmra.mrb[0].mxu0 %v1904
      %v2146 = vpop.f32.mrb[0].mxu0
      %v2147 = vadd.f32 %v1942, %v2146
      %v2148 = vpop.f32.mrb[0].mxu0
      %v2149 = vpop.f32.mrb[0].mxu0
      %v2150 = vadd.f32 %v1942, %v2149
      %v2151 = vpop.f32.mrb[0].mxu0
      %2152 = vmatprep.mubr.bf16.mxu0 0
      %2153 = vmatmul.mubr.bf16.gmra.mrb[0].mxu0 %v1905
      %v2154 = vpop.f32.mrb[0].mxu0
      %v2155 = vadd.f32 %v1942, %v2154
      %v2156 = vpop.f32.mrb[0].mxu0
      %v2157 = vpop.f32.mrb[0].mxu0
      %v2158 = vadd.f32 %v1942, %v2157
      %v2159 = vpop.f32.mrb[0].mxu0
      %2160 = vmatprep.mubr.bf16.mxu0 0
      %2161 = vmatmul.mubr.bf16.gmra.mrb[0].mxu0 %v1906
      %v2162 = vpop.f32.mrb[0].mxu0
      %v2163 = vadd.f32 %v1942, %v2162
      %v2164 = vpop.f32.mrb[0].mxu0
      %v2165 = vpop.f32.mrb[0].mxu0
      %v2166 = vadd.f32 %v1942, %v2165
      %v2167 = vpop.f32.mrb[0].mxu0
      %2168 = vmatprep.mubr.bf16.mxu0 0
      %2169 = vmatmul.mubr.bf16.gmra.mrb[0].mxu0 %v1907
      %v2170 = vpop.f32.mrb[0].mxu0
      %v2171 = vadd.f32 %v1942, %v2170
      %v2172 = vpop.f32.mrb[0].mxu0
      %v2173 = vpop.f32.mrb[0].mxu0
      %v2174 = vadd.f32 %v1942, %v2173
      %v2175 = vpop.f32.mrb[0].mxu0
      %2176 = vmatprep.mubr.bf16.mxu0 0
      %2177 = vmatmul.mubr.bf16.gmra.mrb[0].mxu0 %v1908
      %v2178 = vpop.f32.mrb[0].mxu0
      %v2179 = vadd.f32 %v1942, %v2178
      %v2180 = vpop.f32.mrb[0].mxu0
      %v2181 = vpop.f32.mrb[0].mxu0
      %v2182 = vadd.f32 %v1942, %v2181
      %v2183 = vpop.f32.mrb[0].mxu0
      %2184 = vmatprep.mubr.bf16.mxu0 0
      %2185 = vmatmul.mubr.bf16.gmra.mrb[0].mxu0 %v1909
      %v2186 = vpop.f32.mrb[0].mxu0
      %v2187 = vadd.f32 %v1942, %v2186
      %v2188 = vpop.f32.mrb[0].mxu0
      %v2189 = vpop.f32.mrb[0].mxu0
      %v2190 = vadd.f32 %v1942, %v2189
      %v2191 = vpop.f32.mrb[0].mxu0
      %2192 = vmatprep.mubr.bf16.mxu0 0
      %2193 = vmatmul.mubr.bf16.gmra.mrb[0].mxu0 %v1910
      %v2194 = vpop.f32.mrb[0].mxu0
      %v2195 = vadd.f32 %v1942, %v2194
      %v2196 = vpop.f32.mrb[0].mxu0
      %v2197 = vpop.f32.mrb[0].mxu0
      %v2198 = vadd.f32 %v1942, %v2197
      %v2199 = vpop.f32.mrb[0].mxu0
      %2200 = vmatprep.mubr.bf16.mxu0 0
      %2201 = vmatmul.mubr.bf16.gmra.mrb[0].mxu0 %v1911
      %v2202 = vpop.f32.mrb[0].mxu0
      %v2203 = vadd.f32 %v1942, %v2202
      %v2204 = vpop.f32.mrb[0].mxu0
      %v2205 = vpop.f32.mrb[0].mxu0
      %v2206 = vadd.f32 %v1942, %v2205
      %v2207 = vpop.f32.mrb[0].mxu0
      %2208 = vmatprep.mubr.bf16.mxu0 0
      %2209 = vmatmul.mubr.bf16.gmra.mrb[0].mxu0 %v1912
      %v2210 = vpop.f32.mrb[0].mxu0
      %v2211 = vadd.f32 %v1942, %v2210
      %v2212 = vpop.f32.mrb[0].mxu0
      %v2213 = vpop.f32.mrb[0].mxu0
      %v2214 = vadd.f32 %v1942, %v2213
      %v2215 = vpop.f32.mrb[0].mxu0
      %2216 = vmatprep.mubr.bf16.mxu0 0
      %2217 = vmatmul.mubr.bf16.gmra.mrb[0].mxu0 %v1913
      %v2218 = vpop.f32.mrb[0].mxu0
      %v2219 = vadd.f32 %v1942, %v2218
      %v2220 = vpop.f32.mrb[0].mxu0
      %v2221 = vpop.f32.mrb[0].mxu0
      %v2222 = vadd.f32 %v1942, %v2221
      %v2223 = vpop.f32.mrb[0].mxu0
      %2224 = vmatprep.mubr.bf16.mxu0 0
      %2225 = vmatmul.mubr.bf16.gmra.mrb[0].mxu0 %v1914
      %v2226 = vpop.f32.mrb[0].mxu0
      %v2227 = vadd.f32 %v1942, %v2226
      %v2228 = vpop.f32.mrb[0].mxu0
      %v2229 = vpop.f32.mrb[0].mxu0
      %v2230 = vadd.f32 %v1942, %v2229
      %v2231 = vpop.f32.mrb[0].mxu0
      %2232 = vmatprep.mubr.bf16.mxu0 0
      %2233 = vmatmul.mubr.bf16.gmra.mrb[0].mxu0 %v1915
      %v2234 = vpop.f32.mrb[0].mxu0
      %v2235 = vadd.f32 %v1942, %v2234
      %v2236 = vpop.f32.mrb[0].mxu0
      %v2237 = vpop.f32.mrb[0].mxu0
      %v2238 = vadd.f32 %v1942, %v2237
      %v2239 = vpop.f32.mrb[0].mxu0
      %2240 = vmatprep.mubr.bf16.mxu0 0
      %2241 = vmatmul.mubr.bf16.gmra.mrb[0].mxu0 %v1916
      %v2242 = vpop.f32.mrb[0].mxu0
      %v2243 = vadd.f32 %v1942, %v2242
      %v2244 = vpop.f32.mrb[0].mxu0
      %v2245 = vpop.f32.mrb[0].mxu0
      %v2246 = vadd.f32 %v1942, %v2245
      %v2247 = vpop.f32.mrb[0].mxu0
      %2248 = vmatprep.mubr.bf16.mxu0 0
      %2249 = vmatmul.mubr.bf16.gmra.mrb[0].mxu0 %v1917
      %v2250 = vpop.f32.mrb[0].mxu0
      %v2251 = vadd.f32 %v1942, %v2250
      %v2252 = vpop.f32.mrb[0].mxu0
      %v2253 = vpop.f32.mrb[0].mxu0
      %v2254 = vadd.f32 %v1942, %v2253
      %v2255 = vpop.f32.mrb[0].mxu0
      %2256 = vmatprep.mubr.bf16.mxu0 0
      %2257 = vmatmul.mubr.bf16.gmra.mrb[0].mxu0 %v1918
      %v2258 = vpop.f32.mrb[0].mxu0
      %v2259 = vadd.f32 %v1942, %v2258
      %v2260 = vpop.f32.mrb[0].mxu0
      %v2261 = vpop.f32.mrb[0].mxu0
      %v2262 = vadd.f32 %v1942, %v2261
      %v2263 = vpop.f32.mrb[0].mxu0
      %2264 = vmatprep.mubr.bf16.mxu0 0
      %2265 = vmatmul.mubr.bf16.gmra.mrb[0].mxu0 %v1919
      %v2266 = vpop.f32.mrb[0].mxu0
      %v2267 = vadd.f32 %v1942, %v2266
      %v2268 = vpop.f32.mrb[0].mxu0
      %v2269 = vpop.f32.mrb[0].mxu0
      %v2270 = vadd.f32 %v1942, %v2269
      %v2271 = vpop.f32.mrb[0].mxu0
      %2272 = vmatprep.mubr.bf16.mxu0 0
      %2273 = vmatmul.mubr.bf16.gmra.mrb[0].mxu0 %v1920
      %v2274 = vpop.f32.mrb[0].mxu0
      %v2275 = vadd.f32 %v1942, %v2274
      %v2276 = vpop.f32.mrb[0].mxu0
      %v2277 = vpop.f32.mrb[0].mxu0
      %v2278 = vadd.f32 %v1942, %v2277
      %v2279 = vpop.f32.mrb[0].mxu0
      %2280 = vdwg.mxu0
      %2281 = vst [vmem:[%s283] sm:$0xff] %v2027
      %2282 = vst [vmem:[%s283 + $0x8] sm:$0xff] %v2030
      %2283 = vst [vmem:[%s283 + $0x10] sm:$0xff] %v2035
      %2284 = vst [vmem:[%s283 + $0x18] sm:$0xff] %v2038
      %2285 = vst [vmem:[%s283 + $0x20] sm:$0xff] %v2043
      %2286 = vst [vmem:[%s283 + $0x28] sm:$0xff] %v2046
      %2287 = vst [vmem:[%s283 + $0x30] sm:$0xff] %v2051
      %2288 = vst [vmem:[%s283 + $0x38] sm:$0xff] %v2054
      %2289 = vst [vmem:[%s283 + $0x40] sm:$0xff] %v2059
      %2290 = vst [vmem:[%s283 + $0x48] sm:$0xff] %v2062
      %2291 = vst [vmem:[%s283 + $0x50] sm:$0xff] %v2067
      %2292 = vst [vmem:[%s283 + $0x58] sm:$0xff] %v2070
      %2293 = vst [vmem:[%s283 + $0x60] sm:$0xff] %v2075
      %2294 = vst [vmem:[%s283 + $0x68] sm:$0xff] %v2078
      %2295 = vst [vmem:[%s283 + $0x70] sm:$0xff] %v2083
      %2296 = vst [vmem:[%s283 + $0x78] sm:$0xff] %v2086
      %2297 = vst [vmem:[%s283 + $0x80] sm:$0xff] %v2091
      %2298 = vst [vmem:[%s283 + $0x88] sm:$0xff] %v2094
      %2299 = vst [vmem:[%s283 + $0x90] sm:$0xff] %v2099
      %2300 = vst [vmem:[%s283 + $0x98] sm:$0xff] %v2102
      %2301 = vst [vmem:[%s283 + $0xa0] sm:$0xff] %v2107
      %2302 = vst [vmem:[%s283 + $0xa8] sm:$0xff] %v2110
      %2303 = vst [vmem:[%s283 + $0xb0] sm:$0xff] %v2115
      %2304 = vst [vmem:[%s283 + $0xb8] sm:$0xff] %v2118
      %2305 = vst [vmem:[%s283 + $0xc0] sm:$0xff] %v2123
      %2306 = vst [vmem:[%s283 + $0xc8] sm:$0xff] %v2126
      %2307 = vst [vmem:[%s283 + $0xd0] sm:$0xff] %v2131
      %2308 = vst [vmem:[%s283 + $0xd8] sm:$0xff] %v2134
      %2309 = vst [vmem:[%s283 + $0xe0] sm:$0xff] %v2139
      %2310 = vst [vmem:[%s283 + $0xe8] sm:$0xff] %v2142
      %2311 = vst [vmem:[%s283 + $0xf0] sm:$0xff] %v2147
      %2312 = vst [vmem:[%s283 + $0xf8] sm:$0xff] %v2150
      %2313 = vst [vmem:[%s283 + $0x100] sm:$0xff] %v2155
      %2314 = vst [vmem:[%s283 + $0x108] sm:$0xff] %v2158
      %2315 = vst [vmem:[%s283 + $0x110] sm:$0xff] %v2163
      %2316 = vst [vmem:[%s283 + $0x118] sm:$0xff] %v2166
      %2317 = vst [vmem:[%s283 + $0x120] sm:$0xff] %v2171
      %2318 = vst [vmem:[%s283 + $0x128] sm:$0xff] %v2174
      %2319 = vst [vmem:[%s283 + $0x130] sm:$0xff] %v2179
      %2320 = vst [vmem:[%s283 + $0x138] sm:$0xff] %v2182
      %2321 = vst [vmem:[%s283 + $0x140] sm:$0xff] %v2187
      %2322 = vst [vmem:[%s283 + $0x148] sm:$0xff] %v2190
      %2323 = vst [vmem:[%s283 + $0x150] sm:$0xff] %v2195
      %2324 = vst [vmem:[%s283 + $0x158] sm:$0xff] %v2198
      %2325 = vst [vmem:[%s283 + $0x160] sm:$0xff] %v2203
      %2326 = vst [vmem:[%s283 + $0x168] sm:$0xff] %v2206
      %2327 = vst [vmem:[%s283 + $0x170] sm:$0xff] %v2211
      %2328 = vst [vmem:[%s283 + $0x178] sm:$0xff] %v2214
      %2329 = vst [vmem:[%s283 + $0x180] sm:$0xff] %v2219
      %2330 = vst [vmem:[%s283 + $0x188] sm:$0xff] %v2222
      %2331 = vst [vmem:[%s283 + $0x190] sm:$0xff] %v2227
      %2332 = vst [vmem:[%s283 + $0x198] sm:$0xff] %v2230
      %2333 = vst [vmem:[%s283 + $0x1a0] sm:$0xff] %v2235
      %2334 = vst [vmem:[%s283 + $0x1a8] sm:$0xff] %v2238
      %2335 = vst [vmem:[%s283 + $0x1b0] sm:$0xff] %v2243
      %2336 = vst [vmem:[%s283 + $0x1b8] sm:$0xff] %v2246
      %2337 = vst [vmem:[%s283 + $0x1c0] sm:$0xff] %v2251
      %2338 = vst [vmem:[%s283 + $0x1c8] sm:$0xff] %v2254
      %2339 = vst [vmem:[%s283 + $0x1d0] sm:$0xff] %v2259
      %2340 = vst [vmem:[%s283 + $0x1d8] sm:$0xff] %v2262
      %2341 = vst [vmem:[%s283 + $0x1e0] sm:$0xff] %v2267
      %2342 = vst [vmem:[%s283 + $0x1e8] sm:$0xff] %v2270
      %2343 = vst [vmem:[%s283 + $0x1f0] sm:$0xff] %v2275
      %2344 = vst [vmem:[%s283 + $0x1f8] sm:$0xff] %v2278
      %s2345 = smul.u32 64, %s18
      %p2346 = scmp.lt.s32.totalorder %s2345, 255
      %s2347 = scalar_select %p2346, %s2345, 255
      %s2348 = smul.addr %s2347, 8
      %s2349 = scalar_lea.vmem %s7, %s2348
      // Predicated region
      $region49: #{mlp_forward.1} parent=47 // pred_check
        %p2350 = pneg %p188
      $region50: #{mlp_forward.1} parent=47 // pred_check_branch
        %2352 = sbr.rel (%p2350) target = $region52
      $region51: #{mlp_forward.1} parent=47 // pred_region
        %s2353 = smul.u32 64, %s18
      $region52: #{mlp_forward.1} parent=47 // pred_fallthru
        _
    $region48: #{mlp_forward.1} parent=5 // pred_fallthru
      _
    %p2354 = scmp.le.s32.totalorder 2, %s13
    // Predicated region
    $region53: #{mlp_forward.1} parent=5 // pred_check
      %p2355 = pneg %p2354
    $region54: #{mlp_forward.1} parent=5 // pred_check_branch
      %2357 = sbr.rel (%p2355) target = $region56
    $region55: #{mlp_forward.1} parent=5 // pred_region
      %s2358 = ssub.s32 %s13, 2
      // Predicated region
      $region57: #{mlp_forward.1} parent=55 // pred_check
        %p2359 = pneg %p194
      $region58: #{mlp_forward.1} parent=55 // pred_check_branch
        %2361 = sbr.rel (%p2359) target = $region60
      $region59: #{mlp_forward.1} parent=55 // pred_region
        %s2362 = smul.u32 64, %s19
        %p2363 = scmp.lt.s32.totalorder %s2362, 255
        %s2364 = scalar_select %p2363, %s2362, 255
        %s2365 = smul.addr %s2364, 8
        %s2366 = scalar_lea.vmem %s7, %s2365
      $region60: #{mlp_forward.1} parent=55 // pred_fallthru
        _
    $region56: #{mlp_forward.1} parent=5 // pred_fallthru
      _
  $region6: #{mlp_forward.1} parent=0 // loop_footer
    %s17 = sadd.s32 1, %s13
  $region7: #{mlp_forward.1} parent=0 // loop_footer_branch
    %12 = sbr.rel target = $region3
  $region8: #{mlp_forward.1} parent=0 // loop_exit
    _

</llo_original>
